<compile_context>
chip_gen: v6e
topology: v6e:2x2x1
jax: 0.10.0
libtpu: 0.0.40
codegen_flags: <defaults>
</compile_context>

<pallas_src>
import jax
import jax.numpy as jnp
from jax.experimental import pallas as pl
from jax.experimental.pallas import tpu as pltpu

# ---- static configuration (small, TPU-friendly sizes) ----
N = 32             # num_nodes
DIM_HIDDEN = 32
DIM_MLP = 32
DIM_PRED = 1
NUM_ROUNDS = 2
NUM_LAYERS_F = 4   # forward levels 0..3  (levels 1..3 get updated each round)
GATE_PAD = 128     # each GRU gate pre-activation gets its own 128-lane group


def deepsat_kernel(a_ref, lvl_ref, h0_ref,
                   wbig_ref, bgate_ref,
                   w1_ref, b1_ref, w2_ref, b2_ref, w3_ref, b3_ref,
                   out_ref):
    H = DIM_HIDDEN
    G = GATE_PAD
    n_levels = NUM_LAYERS_F - 1

    # ---- loop-invariant loads / broadcasts hoisted out of the unrolled loop ----
    A_b = a_ref[...]                     # (N, N) bf16 dense adjacency (target x source)
    Wb = wbig_ref[...]                   # (2H, 4G) bf16 fused block weight
    lvl = lvl_ref[...]                   # (N, 1) f32 forward level per node
    masks = [jnp.broadcast_to(lvl == jnp.float32(l), (N, H))
             for l in range(1, n_levels + 1)]

    # compact per-gate biases, sliced once (loop-invariant).  Includes the folded
    # AggConv bias term rowsum(A)*(bm@Wih) as a per-node contribution.
    b_r = bgate_ref[:, 0 * H:1 * H]      # (N, H)  r:  bih_r + bhh_r + agg-bias_r
    b_z = bgate_ref[:, 1 * H:2 * H]      # (N, H)  z:  bih_z + bhh_z + agg-bias_z
    b_in = bgate_ref[:, 2 * H:3 * H]     # (N, H)  i_n: bih_n + agg-bias_n
    b_hn = bgate_ref[:, 3 * H:4 * H]     # (N, H)  h_n: bhh_n

    h = h0_ref[...]                      # (N, H) f32, carried as a value (no scratch)

    # fully unrolled rounds x forward-levels (static trip count = 6)
    for _ in range(NUM_ROUNDS):
        for l in range(1, n_levels + 1):
            h_b = h.astype(jnp.bfloat16)
            # AggConv folded into the GRU input weight: only A @ h remains per iteration
            ah = jnp.dot(A_b, h_b, preferred_element_type=jnp.float32)       # (N, H) f32
            lhs = jnp.concatenate([ah.astype(jnp.bfloat16), h_b], axis=-1)   # (N, 2H)
            # single fused MXU pass -> all four gate pre-activations, each in its own
            # 128-lane group so the slices below fall on vreg boundaries
            g = jnp.dot(lhs, Wb, preferred_element_type=jnp.float32)         # (N, 4G)
            r = jax.nn.sigmoid(g[:, 0 * G:0 * G + H] + b_r)   # i_r + h_r (pre-summed)
            z = jax.nn.sigmoid(g[:, 1 * G:1 * G + H] + b_z)   # i_z + h_z (pre-summed)
            n = jnp.tanh(g[:, 2 * G:2 * G + H] + b_in
                         + r * (g[:, 3 * G:3 * G + H] + b_hn))  # i_n + r*h_n
            h_new = (1.0 - z) * n + z * h
            # scatter back only the rows at the current forward level
            h = jnp.where(masks[l - 1], h_new, h)

    # predictor MLP on the final node embedding (bf16 MXU operands, f32 accumulate)
    z1 = jnp.maximum(jnp.dot(h.astype(jnp.bfloat16), w1_ref[...],
                             preferred_element_type=jnp.float32) + b1_ref[...], 0.0)
    z2 = jnp.maximum(jnp.dot(z1.astype(jnp.bfloat16), w2_ref[...],
                             preferred_element_type=jnp.float32) + b2_ref[...], 0.0)
    # width-1 projection on the VPU + lane reduction (no degenerate MXU pass)
    out_ref[...] = jnp.sum(z2 * w3_ref[...], axis=-1, keepdims=True) + b3_ref[...]


def _fuse_params(A, p):
    """Fold the AggConv Linear into the GRU input weight; build the block-gate weight.

    Fused weight layout (2H, 4*GATE_PAD), contraction over concat([A@h, h]):
      lanes [0*G, 0*G+H) : r pre-activation  = ah@Wf_r + h@Whh_r
      lanes [1*G, 1*G+H) : z pre-activation  = ah@Wf_z + h@Whh_z
      lanes [2*G, 2*G+H) : i_n               = ah@Wf_n
      lanes [3*G, 3*G+H) : h_n               = h@Whh_n
    where Wf = wm_t @ wih_t.  Biases are returned separately as a compact (N, 4H)
    lane-dense array (per-node because rowsum(A)*(bm@wih_t) is absorbed into it).
    """
    H, G = DIM_HIDDEN, GATE_PAD
    wfused = p["wm_t"] @ p["wih_t"]                                             # (H, 3H)
    bias_i = A.sum(axis=1, keepdims=True) * (p["bm"] @ p["wih_t"]) + p["bih"]   # (N, 3H)
    whh, bhh = p["whh_t"], p["bhh"]

    w_big = jnp.zeros((2 * H, 4 * G), jnp.float32)
    w_big = w_big.at[0:H,     0 * G:0 * G + H].set(wfused[:, 0:H])
    w_big = w_big.at[H:2 * H, 0 * G:0 * G + H].set(whh[:, 0:H])
    w_big = w_big.at[0:H,     1 * G:1 * G + H].set(wfused[:, H:2 * H])
    w_big = w_big.at[H:2 * H, 1 * G:1 * G + H].set(whh[:, H:2 * H])
    w_big = w_big.at[0:H,     2 * G:2 * G + H].set(wfused[:, 2 * H:3 * H])
    w_big = w_big.at[H:2 * H, 3 * G:3 * G + H].set(whh[:, 2 * H:3 * H])

    # compact (N, 4H) per-gate bias: [r | z | i_n | h_n]
    b_gate = jnp.concatenate([
        bias_i[:, 0:H] + bhh[:, 0:H],
        bias_i[:, H:2 * H] + bhh[:, H:2 * H],
        bias_i[:, 2 * H:3 * H],
        jnp.broadcast_to(bhh[:, 2 * H:3 * H], (N, H)),
    ], axis=-1)
    return w_big, b_gate


def _deepsat_forward_impl(A, level, p):
    w_big, b_gate = _fuse_params(A, p)
    inputs = (A.astype(jnp.bfloat16), level, p["h0"],
              w_big.astype(jnp.bfloat16), b_gate,
              p["w1_t"].astype(jnp.bfloat16), p["b1"],
              p["w2_t"].astype(jnp.bfloat16), p["b2"],
              p["w3_t"].T, p["b3"])
    return pl.pallas_call(
        deepsat_kernel,
        out_shape=jax.ShapeDtypeStruct((N, DIM_PRED), jnp.float32),
        in_specs=[pl.BlockSpec(memory_space=pltpu.MemorySpace.VMEM)
                  for _ in range(len(inputs))],
        out_specs=pl.BlockSpec(memory_space=pltpu.MemorySpace.VMEM),
    )(*inputs)


deepsat_forward = jax.jit(_deepsat_forward_impl)


# ---------------- pure-JAX reference (mirrors _gru_forward semantics, f32, unfused) ----
def deepsat_ref(A, level, p):
    H = DIM_HIDDEN
    h = p["h0"]
    for _ in range(NUM_ROUNDS):
        for l_idx in range(1, NUM_LAYERS_F):
            per_node_msg = h @ p["wm_t"] + p["bm"]
            agg = A @ per_node_msg
            gi = agg @ p["wih_t"] + p["bih"]
            gh = h @ p["whh_t"] + p["bhh"]
            r = jax.nn.sigmoid(gi[:, :H] + gh[:, :H])
            z = jax.nn.sigmoid(gi[:, H:2 * H] + gh[:, H:2 * H])
            n = jnp.tanh(gi[:, 2 * H:] + r * gh[:, 2 * H:])
            h_new = (1.0 - z) * n + z * h
            h = jnp.where(level == float(l_idx), h_new, h)
    z1 = jnp.maximum(h @ p["w1_t"] + p["b1"], 0.0)
    z2 = jnp.maximum(z1 @ p["w2_t"] + p["b2"], 0.0)
    return z2 @ p["w3_t"] + p["b3"]


def make_params(key):
    H, M, P = DIM_HIDDEN, DIM_MLP, DIM_PRED
    ks = jax.random.split(key, 16)
    s = 1.0 / jnp.sqrt(jnp.float32(H))
    u = lambda k, shape: jax.random.uniform(k, shape, jnp.float32, -s, s)

    # emd_int: Linear(1, H) applied to the constant `one` -> h_init row, repeated per node
    w_e = u(ks[0], (H,))
    b_e = u(ks[1], (H,))
    h0 = jnp.broadcast_to((w_e + b_e)[None, :], (N, H)).astype(jnp.float32)

    params = {
        "h0": h0,
        # AggConv message Linear (stored transposed for right-multiply)
        "wm_t": u(ks[2], (H, H)), "bm": u(ks[3], (1, H)),
        # GRU weights (PyTorch layout (3H, H), stored transposed, gate order r,z,n)
        "wih_t": u(ks[4], (H, 3 * H)), "bih": u(ks[5], (1, 3 * H)),
        "whh_t": u(ks[6], (H, 3 * H)), "bhh": u(ks[7], (1, 3 * H)),
        # predictor MLP
        "w1_t": u(ks[8], (H, M)), "b1": u(ks[9], (1, M)),
        "w2_t": u(ks[10], (M, M)), "b2": u(ks[11], (1, M)),
        "w3_t": u(ks[12], (M, P)), "b3": u(ks[13], (1, P)),
    }
    return params


def make_graph():
    # deterministic layered DAG: 8 nodes per level, levels 0..3
    levels = [i // 8 for i in range(N)]
    A = [[0.0] * N for _ in range(N)]
    for i in range(N):
        l = levels[i]
        if l >= 1:
            src_a = (i - 8)                        # node directly below
            src_b = (l - 1) * 8 + (i * 3) % 8      # a second fan-in at level l-1
            A[i][src_a] = 1.0
            A[i][src_b] = 1.0                      # (may coincide -> single edge)
    A = jnp.array(A, dtype=jnp.float32)
    level = jnp.array(levels, dtype=jnp.float32).reshape(N, 1)
    return A, level


if __name__ == "__main__":
    key = jax.random.PRNGKey(0)
    params = make_params(key)
    A, level = make_graph()

    out = deepsat_forward(A, level, params)
    out = jax.block_until_ready(out)

    ref = deepsat_ref(A, level, params)
    assert out.shape == (N, DIM_PRED)
    # tolerance covers bf16 MXU operands (f32 accumulation, f32 elementwise math)
    assert jnp.allclose(out, ref, atol=3e-2, rtol=3e-2), "mismatch vs JAX reference"

    # TODO(synk): mask/imply_mask, reverse (backward aggregation), LSTM update and the
    # layernorm variants are other config branches of DeepSAT and are not exercised here.
    print("KERNEL_OK")
</pallas_src>

<mosaic_0001>
module attributes {stable_mosaic.version = 11 : i64} {
  func.func @deepsat_kernel(%arg0: memref<32x32xbf16, #tpu.memory_space<vmem>>, %arg1: memref<32x1xf32, #tpu.memory_space<vmem>>, %arg2: memref<32x32xf32, #tpu.memory_space<vmem>>, %arg3: memref<64x512xbf16, #tpu.memory_space<vmem>>, %arg4: memref<32x128xf32, #tpu.memory_space<vmem>>, %arg5: memref<32x32xbf16, #tpu.memory_space<vmem>>, %arg6: memref<1x32xf32, #tpu.memory_space<vmem>>, %arg7: memref<32x32xbf16, #tpu.memory_space<vmem>>, %arg8: memref<1x32xf32, #tpu.memory_space<vmem>>, %arg9: memref<1x32xf32, #tpu.memory_space<vmem>>, %arg10: memref<1x1xf32, #tpu.memory_space<vmem>>, %arg11: memref<32x1xf32, #tpu.memory_space<vmem>>) attributes {dimension_semantics = [], scalar_prefetch = 0 : i64, scratch_operands = 0 : i64, tpu.core_type = #tpu.core_type<tc>} {
    %c0 = arith.constant 0 : index
    %c0_0 = arith.constant 0 : index
    %0 = vector.load %arg0[%c0, %c0_0] : memref<32x32xbf16, #tpu.memory_space<vmem>>, vector<32x32xbf16>
    %c0_1 = arith.constant 0 : index
    %c0_2 = arith.constant 0 : index
    %1 = vector.load %arg3[%c0_1, %c0_2] : memref<64x512xbf16, #tpu.memory_space<vmem>>, vector<64x512xbf16>
    %c0_3 = arith.constant 0 : index
    %c0_4 = arith.constant 0 : index
    %2 = vector.load %arg1[%c0_3, %c0_4] : memref<32x1xf32, #tpu.memory_space<vmem>>, vector<32x1xf32>
    %cst = arith.constant 1.000000e+00 : f32
    %3 = vector.broadcast %cst : f32 to vector<32x1xf32>
    %4 = arith.cmpf oeq, %2, %3 : vector<32x1xf32>
    %5 = vector.shape_cast %4 : vector<32x1xi1> to vector<32x1xi1>
    %6 = vector.broadcast %5 : vector<32x1xi1> to vector<32x32xi1>
    %cst_5 = arith.constant 2.000000e+00 : f32
    %7 = vector.broadcast %cst_5 : f32 to vector<32x1xf32>
    %8 = arith.cmpf oeq, %2, %7 : vector<32x1xf32>
    %9 = vector.shape_cast %8 : vector<32x1xi1> to vector<32x1xi1>
    %10 = vector.broadcast %9 : vector<32x1xi1> to vector<32x32xi1>
    %cst_6 = arith.constant 3.000000e+00 : f32
    %11 = vector.broadcast %cst_6 : f32 to vector<32x1xf32>
    %12 = arith.cmpf oeq, %2, %11 : vector<32x1xf32>
    %13 = vector.shape_cast %12 : vector<32x1xi1> to vector<32x1xi1>
    %14 = vector.broadcast %13 : vector<32x1xi1> to vector<32x32xi1>
    %c0_7 = arith.constant 0 : index
    %c0_8 = arith.constant 0 : index
    %15 = vector.load %arg4[%c0_7, %c0_8] : memref<32x128xf32, #tpu.memory_space<vmem>>, vector<32x32xf32>
    %c0_9 = arith.constant 0 : index
    %c32 = arith.constant 32 : index
    %16 = vector.load %arg4[%c0_9, %c32] : memref<32x128xf32, #tpu.memory_space<vmem>>, vector<32x32xf32>
    %c0_10 = arith.constant 0 : index
    %c64 = arith.constant 64 : index
    %17 = vector.load %arg4[%c0_10, %c64] : memref<32x128xf32, #tpu.memory_space<vmem>>, vector<32x32xf32>
    %c0_11 = arith.constant 0 : index
    %c96 = arith.constant 96 : index
    %18 = vector.load %arg4[%c0_11, %c96] : memref<32x128xf32, #tpu.memory_space<vmem>>, vector<32x32xf32>
    %c0_12 = arith.constant 0 : index
    %c0_13 = arith.constant 0 : index
    %19 = vector.load %arg2[%c0_12, %c0_13] : memref<32x32xf32, #tpu.memory_space<vmem>>, vector<32x32xf32>
    %20 = arith.truncf %19 : vector<32x32xf32> to vector<32x32xbf16>
    %cst_14 = arith.constant dense<0.000000e+00> : vector<32x32xf32>
    %21 = tpu.matmul %0, %20, %cst_14 {dimension_numbers = #tpu.dot_dimension_numbers<[1], [0], [0], [1], [0, 0, 1, 1], [], []>} : vector<32x32xbf16>, vector<32x32xbf16>, vector<32x32xf32> -> vector<32x32xf32>
    %22 = arith.truncf %21 : vector<32x32xf32> to vector<32x32xbf16>
    %23 = tpu.concatenate %22, %20 in 1 : vector<32x32xbf16>, vector<32x32xbf16> -> vector<32x64xbf16>
    %cst_15 = arith.constant dense<0.000000e+00> : vector<32x512xf32>
    %24 = tpu.matmul %23, %1, %cst_15 {dimension_numbers = #tpu.dot_dimension_numbers<[1], [0], [0], [1], [0, 0, 1, 1], [], []>} : vector<32x64xbf16>, vector<64x512xbf16>, vector<32x512xf32> -> vector<32x512xf32>
    %25 = vector.extract_strided_slice %24 {offsets = [0, 0], sizes = [32, 32], strides = [1, 1]} : vector<32x512xf32> to vector<32x32xf32>
    %26 = arith.addf %25, %15 : vector<32x32xf32>
    %27 = arith.negf %26 : vector<32x32xf32>
    %28 = math.exp %27 : vector<32x32xf32>
    %cst_16 = arith.constant 1.000000e+00 : f32
    %29 = vector.broadcast %cst_16 : f32 to vector<32x32xf32>
    %30 = arith.addf %29, %28 : vector<32x32xf32>
    %31 = arith.divf %29, %30 : vector<32x32xf32>
    %32 = vector.extract_strided_slice %24 {offsets = [0, 128], sizes = [32, 32], strides = [1, 1]} : vector<32x512xf32> to vector<32x32xf32>
    %33 = arith.addf %32, %16 : vector<32x32xf32>
    %34 = arith.negf %33 : vector<32x32xf32>
    %35 = math.exp %34 : vector<32x32xf32>
    %cst_17 = arith.constant 1.000000e+00 : f32
    %36 = vector.broadcast %cst_17 : f32 to vector<32x32xf32>
    %37 = arith.addf %36, %35 : vector<32x32xf32>
    %38 = arith.divf %36, %37 : vector<32x32xf32>
    %39 = vector.extract_strided_slice %24 {offsets = [0, 256], sizes = [32, 32], strides = [1, 1]} : vector<32x512xf32> to vector<32x32xf32>
    %40 = arith.addf %39, %17 : vector<32x32xf32>
    %41 = vector.extract_strided_slice %24 {offsets = [0, 384], sizes = [32, 32], strides = [1, 1]} : vector<32x512xf32> to vector<32x32xf32>
    %42 = arith.addf %41, %18 : vector<32x32xf32>
    %43 = arith.mulf %31, %42 : vector<32x32xf32>
    %44 = arith.addf %40, %43 : vector<32x32xf32>
    %45 = math.tanh %44 : vector<32x32xf32>
    %cst_18 = arith.constant 1.000000e+00 : f32
    %46 = vector.broadcast %cst_18 : f32 to vector<32x32xf32>
    %47 = arith.subf %46, %38 : vector<32x32xf32>
    %48 = arith.mulf %47, %45 : vector<32x32xf32>
    %49 = arith.mulf %38, %19 : vector<32x32xf32>
    %50 = arith.addf %48, %49 : vector<32x32xf32>
    %51 = arith.select %6, %50, %19 : vector<32x32xi1>, vector<32x32xf32>
    %52 = arith.truncf %51 : vector<32x32xf32> to vector<32x32xbf16>
    %cst_19 = arith.constant dense<0.000000e+00> : vector<32x32xf32>
    %53 = tpu.matmul %0, %52, %cst_19 {dimension_numbers = #tpu.dot_dimension_numbers<[1], [0], [0], [1], [0, 0, 1, 1], [], []>} : vector<32x32xbf16>, vector<32x32xbf16>, vector<32x32xf32> -> vector<32x32xf32>
    %54 = arith.truncf %53 : vector<32x32xf32> to vector<32x32xbf16>
    %55 = tpu.concatenate %54, %52 in 1 : vector<32x32xbf16>, vector<32x32xbf16> -> vector<32x64xbf16>
    %cst_20 = arith.constant dense<0.000000e+00> : vector<32x512xf32>
    %56 = tpu.matmul %55, %1, %cst_20 {dimension_numbers = #tpu.dot_dimension_numbers<[1], [0], [0], [1], [0, 0, 1, 1], [], []>} : vector<32x64xbf16>, vector<64x512xbf16>, vector<32x512xf32> -> vector<32x512xf32>
    %57 = vector.extract_strided_slice %56 {offsets = [0, 0], sizes = [32, 32], strides = [1, 1]} : vector<32x512xf32> to vector<32x32xf32>
    %58 = arith.addf %57, %15 : vector<32x32xf32>
    %59 = arith.negf %58 : vector<32x32xf32>
    %60 = math.exp %59 : vector<32x32xf32>
    %cst_21 = arith.constant 1.000000e+00 : f32
    %61 = vector.broadcast %cst_21 : f32 to vector<32x32xf32>
    %62 = arith.addf %61, %60 : vector<32x32xf32>
    %63 = arith.divf %61, %62 : vector<32x32xf32>
    %64 = vector.extract_strided_slice %56 {offsets = [0, 128], sizes = [32, 32], strides = [1, 1]} : vector<32x512xf32> to vector<32x32xf32>
    %65 = arith.addf %64, %16 : vector<32x32xf32>
    %66 = arith.negf %65 : vector<32x32xf32>
    %67 = math.exp %66 : vector<32x32xf32>
    %cst_22 = arith.constant 1.000000e+00 : f32
    %68 = vector.broadcast %cst_22 : f32 to vector<32x32xf32>
    %69 = arith.addf %68, %67 : vector<32x32xf32>
    %70 = arith.divf %68, %69 : vector<32x32xf32>
    %71 = vector.extract_strided_slice %56 {offsets = [0, 256], sizes = [32, 32], strides = [1, 1]} : vector<32x512xf32> to vector<32x32xf32>
    %72 = arith.addf %71, %17 : vector<32x32xf32>
    %73 = vector.extract_strided_slice %56 {offsets = [0, 384], sizes = [32, 32], strides = [1, 1]} : vector<32x512xf32> to vector<32x32xf32>
    %74 = arith.addf %73, %18 : vector<32x32xf32>
    %75 = arith.mulf %63, %74 : vector<32x32xf32>
    %76 = arith.addf %72, %75 : vector<32x32xf32>
    %77 = math.tanh %76 : vector<32x32xf32>
    %cst_23 = arith.constant 1.000000e+00 : f32
    %78 = vector.broadcast %cst_23 : f32 to vector<32x32xf32>
    %79 = arith.subf %78, %70 : vector<32x32xf32>
    %80 = arith.mulf %79, %77 : vector<32x32xf32>
    %81 = arith.mulf %70, %51 : vector<32x32xf32>
    %82 = arith.addf %80, %81 : vector<32x32xf32>
    %83 = arith.select %10, %82, %51 : vector<32x32xi1>, vector<32x32xf32>
    %84 = arith.truncf %83 : vector<32x32xf32> to vector<32x32xbf16>
    %cst_24 = arith.constant dense<0.000000e+00> : vector<32x32xf32>
    %85 = tpu.matmul %0, %84, %cst_24 {dimension_numbers = #tpu.dot_dimension_numbers<[1], [0], [0], [1], [0, 0, 1, 1], [], []>} : vector<32x32xbf16>, vector<32x32xbf16>, vector<32x32xf32> -> vector<32x32xf32>
    %86 = arith.truncf %85 : vector<32x32xf32> to vector<32x32xbf16>
    %87 = tpu.concatenate %86, %84 in 1 : vector<32x32xbf16>, vector<32x32xbf16> -> vector<32x64xbf16>
    %cst_25 = arith.constant dense<0.000000e+00> : vector<32x512xf32>
    %88 = tpu.matmul %87, %1, %cst_25 {dimension_numbers = #tpu.dot_dimension_numbers<[1], [0], [0], [1], [0, 0, 1, 1], [], []>} : vector<32x64xbf16>, vector<64x512xbf16>, vector<32x512xf32> -> vector<32x512xf32>
    %89 = vector.extract_strided_slice %88 {offsets = [0, 0], sizes = [32, 32], strides = [1, 1]} : vector<32x512xf32> to vector<32x32xf32>
    %90 = arith.addf %89, %15 : vector<32x32xf32>
    %91 = arith.negf %90 : vector<32x32xf32>
    %92 = math.exp %91 : vector<32x32xf32>
    %cst_26 = arith.constant 1.000000e+00 : f32
    %93 = vector.broadcast %cst_26 : f32 to vector<32x32xf32>
    %94 = arith.addf %93, %92 : vector<32x32xf32>
    %95 = arith.divf %93, %94 : vector<32x32xf32>
    %96 = vector.extract_strided_slice %88 {offsets = [0, 128], sizes = [32, 32], strides = [1, 1]} : vector<32x512xf32> to vector<32x32xf32>
    %97 = arith.addf %96, %16 : vector<32x32xf32>
    %98 = arith.negf %97 : vector<32x32xf32>
    %99 = math.exp %98 : vector<32x32xf32>
    %cst_27 = arith.constant 1.000000e+00 : f32
    %100 = vector.broadcast %cst_27 : f32 to vector<32x32xf32>
    %101 = arith.addf %100, %99 : vector<32x32xf32>
    %102 = arith.divf %100, %101 : vector<32x32xf32>
    %103 = vector.extract_strided_slice %88 {offsets = [0, 256], sizes = [32, 32], strides = [1, 1]} : vector<32x512xf32> to vector<32x32xf32>
    %104 = arith.addf %103, %17 : vector<32x32xf32>
    %105 = vector.extract_strided_slice %88 {offsets = [0, 384], sizes = [32, 32], strides = [1, 1]} : vector<32x512xf32> to vector<32x32xf32>
    %106 = arith.addf %105, %18 : vector<32x32xf32>
    %107 = arith.mulf %95, %106 : vector<32x32xf32>
    %108 = arith.addf %104, %107 : vector<32x32xf32>
    %109 = math.tanh %108 : vector<32x32xf32>
    %cst_28 = arith.constant 1.000000e+00 : f32
    %110 = vector.broadcast %cst_28 : f32 to vector<32x32xf32>
    %111 = arith.subf %110, %102 : vector<32x32xf32>
    %112 = arith.mulf %111, %109 : vector<32x32xf32>
    %113 = arith.mulf %102, %83 : vector<32x32xf32>
    %114 = arith.addf %112, %113 : vector<32x32xf32>
    %115 = arith.select %14, %114, %83 : vector<32x32xi1>, vector<32x32xf32>
    %116 = arith.truncf %115 : vector<32x32xf32> to vector<32x32xbf16>
    %cst_29 = arith.constant dense<0.000000e+00> : vector<32x32xf32>
    %117 = tpu.matmul %0, %116, %cst_29 {dimension_numbers = #tpu.dot_dimension_numbers<[1], [0], [0], [1], [0, 0, 1, 1], [], []>} : vector<32x32xbf16>, vector<32x32xbf16>, vector<32x32xf32> -> vector<32x32xf32>
    %118 = arith.truncf %117 : vector<32x32xf32> to vector<32x32xbf16>
    %119 = tpu.concatenate %118, %116 in 1 : vector<32x32xbf16>, vector<32x32xbf16> -> vector<32x64xbf16>
    %cst_30 = arith.constant dense<0.000000e+00> : vector<32x512xf32>
    %120 = tpu.matmul %119, %1, %cst_30 {dimension_numbers = #tpu.dot_dimension_numbers<[1], [0], [0], [1], [0, 0, 1, 1], [], []>} : vector<32x64xbf16>, vector<64x512xbf16>, vector<32x512xf32> -> vector<32x512xf32>
    %121 = vector.extract_strided_slice %120 {offsets = [0, 0], sizes = [32, 32], strides = [1, 1]} : vector<32x512xf32> to vector<32x32xf32>
    %122 = arith.addf %121, %15 : vector<32x32xf32>
    %123 = arith.negf %122 : vector<32x32xf32>
    %124 = math.exp %123 : vector<32x32xf32>
    %cst_31 = arith.constant 1.000000e+00 : f32
    %125 = vector.broadcast %cst_31 : f32 to vector<32x32xf32>
    %126 = arith.addf %125, %124 : vector<32x32xf32>
    %127 = arith.divf %125, %126 : vector<32x32xf32>
    %128 = vector.extract_strided_slice %120 {offsets = [0, 128], sizes = [32, 32], strides = [1, 1]} : vector<32x512xf32> to vector<32x32xf32>
    %129 = arith.addf %128, %16 : vector<32x32xf32>
    %130 = arith.negf %129 : vector<32x32xf32>
    %131 = math.exp %130 : vector<32x32xf32>
    %cst_32 = arith.constant 1.000000e+00 : f32
    %132 = vector.broadcast %cst_32 : f32 to vector<32x32xf32>
    %133 = arith.addf %132, %131 : vector<32x32xf32>
    %134 = arith.divf %132, %133 : vector<32x32xf32>
    %135 = vector.extract_strided_slice %120 {offsets = [0, 256], sizes = [32, 32], strides = [1, 1]} : vector<32x512xf32> to vector<32x32xf32>
    %136 = arith.addf %135, %17 : vector<32x32xf32>
    %137 = vector.extract_strided_slice %120 {offsets = [0, 384], sizes = [32, 32], strides = [1, 1]} : vector<32x512xf32> to vector<32x32xf32>
    %138 = arith.addf %137, %18 : vector<32x32xf32>
    %139 = arith.mulf %127, %138 : vector<32x32xf32>
    %140 = arith.addf %136, %139 : vector<32x32xf32>
    %141 = math.tanh %140 : vector<32x32xf32>
    %cst_33 = arith.constant 1.000000e+00 : f32
    %142 = vector.broadcast %cst_33 : f32 to vector<32x32xf32>
    %143 = arith.subf %142, %134 : vector<32x32xf32>
    %144 = arith.mulf %143, %141 : vector<32x32xf32>
    %145 = arith.mulf %134, %115 : vector<32x32xf32>
    %146 = arith.addf %144, %145 : vector<32x32xf32>
    %147 = arith.select %6, %146, %115 : vector<32x32xi1>, vector<32x32xf32>
    %148 = arith.truncf %147 : vector<32x32xf32> to vector<32x32xbf16>
    %cst_34 = arith.constant dense<0.000000e+00> : vector<32x32xf32>
    %149 = tpu.matmul %0, %148, %cst_34 {dimension_numbers = #tpu.dot_dimension_numbers<[1], [0], [0], [1], [0, 0, 1, 1], [], []>} : vector<32x32xbf16>, vector<32x32xbf16>, vector<32x32xf32> -> vector<32x32xf32>
    %150 = arith.truncf %149 : vector<32x32xf32> to vector<32x32xbf16>
    %151 = tpu.concatenate %150, %148 in 1 : vector<32x32xbf16>, vector<32x32xbf16> -> vector<32x64xbf16>
    %cst_35 = arith.constant dense<0.000000e+00> : vector<32x512xf32>
    %152 = tpu.matmul %151, %1, %cst_35 {dimension_numbers = #tpu.dot_dimension_numbers<[1], [0], [0], [1], [0, 0, 1, 1], [], []>} : vector<32x64xbf16>, vector<64x512xbf16>, vector<32x512xf32> -> vector<32x512xf32>
    %153 = vector.extract_strided_slice %152 {offsets = [0, 0], sizes = [32, 32], strides = [1, 1]} : vector<32x512xf32> to vector<32x32xf32>
    %154 = arith.addf %153, %15 : vector<32x32xf32>
    %155 = arith.negf %154 : vector<32x32xf32>
    %156 = math.exp %155 : vector<32x32xf32>
    %cst_36 = arith.constant 1.000000e+00 : f32
    %157 = vector.broadcast %cst_36 : f32 to vector<32x32xf32>
    %158 = arith.addf %157, %156 : vector<32x32xf32>
    %159 = arith.divf %157, %158 : vector<32x32xf32>
    %160 = vector.extract_strided_slice %152 {offsets = [0, 128], sizes = [32, 32], strides = [1, 1]} : vector<32x512xf32> to vector<32x32xf32>
    %161 = arith.addf %160, %16 : vector<32x32xf32>
    %162 = arith.negf %161 : vector<32x32xf32>
    %163 = math.exp %162 : vector<32x32xf32>
    %cst_37 = arith.constant 1.000000e+00 : f32
    %164 = vector.broadcast %cst_37 : f32 to vector<32x32xf32>
    %165 = arith.addf %164, %163 : vector<32x32xf32>
    %166 = arith.divf %164, %165 : vector<32x32xf32>
    %167 = vector.extract_strided_slice %152 {offsets = [0, 256], sizes = [32, 32], strides = [1, 1]} : vector<32x512xf32> to vector<32x32xf32>
    %168 = arith.addf %167, %17 : vector<32x32xf32>
    %169 = vector.extract_strided_slice %152 {offsets = [0, 384], sizes = [32, 32], strides = [1, 1]} : vector<32x512xf32> to vector<32x32xf32>
    %170 = arith.addf %169, %18 : vector<32x32xf32>
    %171 = arith.mulf %159, %170 : vector<32x32xf32>
    %172 = arith.addf %168, %171 : vector<32x32xf32>
    %173 = math.tanh %172 : vector<32x32xf32>
    %cst_38 = arith.constant 1.000000e+00 : f32
    %174 = vector.broadcast %cst_38 : f32 to vector<32x32xf32>
    %175 = arith.subf %174, %166 : vector<32x32xf32>
    %176 = arith.mulf %175, %173 : vector<32x32xf32>
    %177 = arith.mulf %166, %147 : vector<32x32xf32>
    %178 = arith.addf %176, %177 : vector<32x32xf32>
    %179 = arith.select %10, %178, %147 : vector<32x32xi1>, vector<32x32xf32>
    %180 = arith.truncf %179 : vector<32x32xf32> to vector<32x32xbf16>
    %cst_39 = arith.constant dense<0.000000e+00> : vector<32x32xf32>
    %181 = tpu.matmul %0, %180, %cst_39 {dimension_numbers = #tpu.dot_dimension_numbers<[1], [0], [0], [1], [0, 0, 1, 1], [], []>} : vector<32x32xbf16>, vector<32x32xbf16>, vector<32x32xf32> -> vector<32x32xf32>
    %182 = arith.truncf %181 : vector<32x32xf32> to vector<32x32xbf16>
    %183 = tpu.concatenate %182, %180 in 1 : vector<32x32xbf16>, vector<32x32xbf16> -> vector<32x64xbf16>
    %cst_40 = arith.constant dense<0.000000e+00> : vector<32x512xf32>
    %184 = tpu.matmul %183, %1, %cst_40 {dimension_numbers = #tpu.dot_dimension_numbers<[1], [0], [0], [1], [0, 0, 1, 1], [], []>} : vector<32x64xbf16>, vector<64x512xbf16>, vector<32x512xf32> -> vector<32x512xf32>
    %185 = vector.extract_strided_slice %184 {offsets = [0, 0], sizes = [32, 32], strides = [1, 1]} : vector<32x512xf32> to vector<32x32xf32>
    %186 = arith.addf %185, %15 : vector<32x32xf32>
    %187 = arith.negf %186 : vector<32x32xf32>
    %188 = math.exp %187 : vector<32x32xf32>
    %cst_41 = arith.constant 1.000000e+00 : f32
    %189 = vector.broadcast %cst_41 : f32 to vector<32x32xf32>
    %190 = arith.addf %189, %188 : vector<32x32xf32>
    %191 = arith.divf %189, %190 : vector<32x32xf32>
    %192 = vector.extract_strided_slice %184 {offsets = [0, 128], sizes = [32, 32], strides = [1, 1]} : vector<32x512xf32> to vector<32x32xf32>
    %193 = arith.addf %192, %16 : vector<32x32xf32>
    %194 = arith.negf %193 : vector<32x32xf32>
    %195 = math.exp %194 : vector<32x32xf32>
    %cst_42 = arith.constant 1.000000e+00 : f32
    %196 = vector.broadcast %cst_42 : f32 to vector<32x32xf32>
    %197 = arith.addf %196, %195 : vector<32x32xf32>
    %198 = arith.divf %196, %197 : vector<32x32xf32>
    %199 = vector.extract_strided_slice %184 {offsets = [0, 256], sizes = [32, 32], strides = [1, 1]} : vector<32x512xf32> to vector<32x32xf32>
    %200 = arith.addf %199, %17 : vector<32x32xf32>
    %201 = vector.extract_strided_slice %184 {offsets = [0, 384], sizes = [32, 32], strides = [1, 1]} : vector<32x512xf32> to vector<32x32xf32>
    %202 = arith.addf %201, %18 : vector<32x32xf32>
    %203 = arith.mulf %191, %202 : vector<32x32xf32>
    %204 = arith.addf %200, %203 : vector<32x32xf32>
    %205 = math.tanh %204 : vector<32x32xf32>
    %cst_43 = arith.constant 1.000000e+00 : f32
    %206 = vector.broadcast %cst_43 : f32 to vector<32x32xf32>
    %207 = arith.subf %206, %198 : vector<32x32xf32>
    %208 = arith.mulf %207, %205 : vector<32x32xf32>
    %209 = arith.mulf %198, %179 : vector<32x32xf32>
    %210 = arith.addf %208, %209 : vector<32x32xf32>
    %211 = arith.select %14, %210, %179 : vector<32x32xi1>, vector<32x32xf32>
    %212 = arith.truncf %211 : vector<32x32xf32> to vector<32x32xbf16>
    %c0_44 = arith.constant 0 : index
    %c0_45 = arith.constant 0 : index
    %213 = vector.load %arg5[%c0_44, %c0_45] : memref<32x32xbf16, #tpu.memory_space<vmem>>, vector<32x32xbf16>
    %cst_46 = arith.constant dense<0.000000e+00> : vector<32x32xf32>
    %214 = tpu.matmul %212, %213, %cst_46 {dimension_numbers = #tpu.dot_dimension_numbers<[1], [0], [0], [1], [0, 0, 1, 1], [], []>} : vector<32x32xbf16>, vector<32x32xbf16>, vector<32x32xf32> -> vector<32x32xf32>
    %c0_47 = arith.constant 0 : index
    %c0_48 = arith.constant 0 : index
    %215 = vector.load %arg6[%c0_47, %c0_48] : memref<1x32xf32, #tpu.memory_space<vmem>>, vector<1x32xf32>
    %216 = vector.broadcast %215 : vector<1x32xf32> to vector<32x32xf32>
    %217 = arith.addf %214, %216 : vector<32x32xf32>
    %cst_49 = arith.constant 0.000000e+00 : f32
    %218 = vector.broadcast %cst_49 : f32 to vector<32x32xf32>
    %219 = arith.maximumf %217, %218 : vector<32x32xf32>
    %220 = arith.truncf %219 : vector<32x32xf32> to vector<32x32xbf16>
    %c0_50 = arith.constant 0 : index
    %c0_51 = arith.constant 0 : index
    %221 = vector.load %arg7[%c0_50, %c0_51] : memref<32x32xbf16, #tpu.memory_space<vmem>>, vector<32x32xbf16>
    %cst_52 = arith.constant dense<0.000000e+00> : vector<32x32xf32>
    %222 = tpu.matmul %220, %221, %cst_52 {dimension_numbers = #tpu.dot_dimension_numbers<[1], [0], [0], [1], [0, 0, 1, 1], [], []>} : vector<32x32xbf16>, vector<32x32xbf16>, vector<32x32xf32> -> vector<32x32xf32>
    %c0_53 = arith.constant 0 : index
    %c0_54 = arith.constant 0 : index
    %223 = vector.load %arg8[%c0_53, %c0_54] : memref<1x32xf32, #tpu.memory_space<vmem>>, vector<1x32xf32>
    %224 = vector.broadcast %223 : vector<1x32xf32> to vector<32x32xf32>
    %225 = arith.addf %222, %224 : vector<32x32xf32>
    %cst_55 = arith.constant 0.000000e+00 : f32
    %226 = vector.broadcast %cst_55 : f32 to vector<32x32xf32>
    %227 = arith.maximumf %225, %226 : vector<32x32xf32>
    %c0_56 = arith.constant 0 : index
    %c0_57 = arith.constant 0 : index
    %228 = vector.load %arg9[%c0_56, %c0_57] : memref<1x32xf32, #tpu.memory_space<vmem>>, vector<1x32xf32>
    %229 = vector.broadcast %228 : vector<1x32xf32> to vector<32x32xf32>
    %230 = arith.mulf %227, %229 : vector<32x32xf32>
    %cst_58 = arith.constant dense<0.000000e+00> : vector<32xf32>
    %231 = vector.multi_reduction <add>, %230, %cst_58 [1] : vector<32x32xf32> to vector<32xf32>
    %232 = vector.shape_cast %231 : vector<32xf32> to vector<32x1xf32>
    %c0_59 = arith.constant 0 : index
    %c0_60 = arith.constant 0 : index
    %233 = vector.load %arg10[%c0_59, %c0_60] : memref<1x1xf32, #tpu.memory_space<vmem>>, vector<1x1xf32>
    %234 = vector.broadcast %233 : vector<1x1xf32> to vector<32x1xf32>
    %235 = arith.addf %232, %234 : vector<32x1xf32>
    %c0_61 = arith.constant 0 : index
    %c0_62 = arith.constant 0 : index
    %236 = vector.load %arg11[%c0_61, %c0_62] : memref<32x1xf32, #tpu.memory_space<vmem>>, vector<32x1xf32>
    tpu.vector_store %arg11[%c0_61, %c0_62], %235 {strides = array<i32>} : memref<32x1xf32, #tpu.memory_space<vmem>>, vector<32x1xf32>,
    return
  }
}

</mosaic_0001>

<llo_original>
// kernel: _deepsat_forward_impl.1
$region0: #{_deepsat_forward_impl.1}
  #allocation0 [shape = 'u32[]', space=smem, size = 0x4, offset = 0x4, fixed_abs, tag = 'smem constant byte address 0x4 - core index']
  #allocation1 [shape = 'u32[144,128]{1,0:T(1,128)}', space=vmem, size = 0x12000, scoped, tag = 'internal scratch']
  #allocation2 [shape = 'f32[1,1]{1,0:T(1,128)S(1)}', space=vmem, size = 0x200, scoped, tag = 'scoped memory for _deepsat_forward_impl.1']
  %s0 = inlined_call_operand.vmem [shape: bf16[32,32], index: 0, kind: input, shape index: {}]
  %s1 = inlined_call_operand.vmem [shape: f32[32,1], index: 1, kind: input, shape index: {}]
  %s2 = inlined_call_operand.vmem [shape: f32[32,32], index: 2, kind: input, shape index: {}]
  %s3 = inlined_call_operand.vmem [shape: bf16[64,512], index: 3, kind: input, shape index: {}]
  %s4 = inlined_call_operand.vmem [shape: f32[32,128], index: 4, kind: input, shape index: {}]
  %s5 = inlined_call_operand.vmem [shape: bf16[32,32], index: 5, kind: input, shape index: {}]
  %s6 = inlined_call_operand.vmem [shape: f32[1,32], index: 6, kind: input, shape index: {}]
  %s7 = inlined_call_operand.vmem [shape: bf16[32,32], index: 7, kind: input, shape index: {}]
  %s8 = inlined_call_operand.vmem [shape: f32[1,32], index: 8, kind: input, shape index: {}]
  %s9 = inlined_call_operand.vmem [shape: f32[1,32], index: 9, kind: input, shape index: {}]
  %s10 = inlined_call_operand.<no memory space> [shape: f32[1,1], index: 10, kind: input, shape index: {}]
  %s11 = inlined_call_operand.vmem [shape: f32[32,1], index: 11, kind: output, shape index: {}]
  %s12 = sld [smem:[#allocation0]]
  $region54: #{_deepsat_forward_impl.1} parent=0
    _
  %s14 = ssub.s32 1, %s12
  %s15 = scalar_select 0, %s14, %s12
  %v16 = vstv %s10
  %17 = vst [vmem:[#allocation2] sm:$0x1] %v16
  // Predicated region
  $region2: #{_deepsat_forward_impl.1} parent=0 // pred_check
    _
  $region3: #{_deepsat_forward_impl.1} parent=0 // pred_check_branch
    %19 = sbr.rel (0) target = $region5
  $region4: #{_deepsat_forward_impl.1} parent=0 // pred_region
    _
  $region5: #{_deepsat_forward_impl.1} parent=0 // pred_fallthru
    _
  // Predicated region
  $region6: #{_deepsat_forward_impl.1} parent=0 // pred_check
    _
  $region7: #{_deepsat_forward_impl.1} parent=0 // pred_check_branch
    %21 = sbr.rel (0) target = $region9
  $region8: #{_deepsat_forward_impl.1} parent=0 // pred_region
    _
  $region9: #{_deepsat_forward_impl.1} parent=0 // pred_fallthru
    _
  // Predicated region
  $region10: #{_deepsat_forward_impl.1} parent=0 // pred_check
    _
  $region11: #{_deepsat_forward_impl.1} parent=0 // pred_check_branch
    %23 = sbr.rel (0) target = $region13
  $region12: #{_deepsat_forward_impl.1} parent=0 // pred_region
    _
  $region13: #{_deepsat_forward_impl.1} parent=0 // pred_fallthru
    _
  // Predicated region
  $region14: #{_deepsat_forward_impl.1} parent=0 // pred_check
    _
  $region15: #{_deepsat_forward_impl.1} parent=0 // pred_check_branch
    %25 = sbr.rel (0) target = $region17
  $region16: #{_deepsat_forward_impl.1} parent=0 // pred_region
    _
  $region17: #{_deepsat_forward_impl.1} parent=0 // pred_fallthru
    _
  // Predicated region
  $region18: #{_deepsat_forward_impl.1} parent=0 // pred_check
    _
  $region19: #{_deepsat_forward_impl.1} parent=0 // pred_check_branch
    %27 = sbr.rel (0) target = $region21
  $region20: #{_deepsat_forward_impl.1} parent=0 // pred_region
    _
  $region21: #{_deepsat_forward_impl.1} parent=0 // pred_fallthru
    _
  // Predicated region
  $region22: #{_deepsat_forward_impl.1} parent=0 // pred_check
    _
  $region23: #{_deepsat_forward_impl.1} parent=0 // pred_check_branch
    %29 = sbr.rel (0) target = $region25
  $region24: #{_deepsat_forward_impl.1} parent=0 // pred_region
    _
  $region25: #{_deepsat_forward_impl.1} parent=0 // pred_fallthru
    _
  // Predicated region
  $region26: #{_deepsat_forward_impl.1} parent=0 // pred_check
    _
  $region27: #{_deepsat_forward_impl.1} parent=0 // pred_check_branch
    %31 = sbr.rel (0) target = $region29
  $region28: #{_deepsat_forward_impl.1} parent=0 // pred_region
    _
  $region29: #{_deepsat_forward_impl.1} parent=0 // pred_fallthru
    _
  // Predicated region
  $region30: #{_deepsat_forward_impl.1} parent=0 // pred_check
    _
  $region31: #{_deepsat_forward_impl.1} parent=0 // pred_check_branch
    %33 = sbr.rel (0) target = $region33
  $region32: #{_deepsat_forward_impl.1} parent=0 // pred_region
    _
  $region33: #{_deepsat_forward_impl.1} parent=0 // pred_fallthru
    _
  // Predicated region
  $region34: #{_deepsat_forward_impl.1} parent=0 // pred_check
    _
  $region35: #{_deepsat_forward_impl.1} parent=0 // pred_check_branch
    %35 = sbr.rel (0) target = $region37
  $region36: #{_deepsat_forward_impl.1} parent=0 // pred_region
    _
  $region37: #{_deepsat_forward_impl.1} parent=0 // pred_fallthru
    _
  // Predicated region
  $region38: #{_deepsat_forward_impl.1} parent=0 // pred_check
    _
  $region39: #{_deepsat_forward_impl.1} parent=0 // pred_check_branch
    %37 = sbr.rel (0) target = $region41
  $region40: #{_deepsat_forward_impl.1} parent=0 // pred_region
    _
  $region41: #{_deepsat_forward_impl.1} parent=0 // pred_fallthru
    _
  // Predicated region
  $region42: #{_deepsat_forward_impl.1} parent=0 // pred_check
    _
  $region43: #{_deepsat_forward_impl.1} parent=0 // pred_check_branch
    %39 = sbr.rel (0) target = $region45
  $region44: #{_deepsat_forward_impl.1} parent=0 // pred_region
    _
  $region45: #{_deepsat_forward_impl.1} parent=0 // pred_fallthru
    _
  %v41 = vld [vmem:[%s0] sm:$0xf]
  %v42 = vld [vmem:[%s0 + $0x4] sm:$0xf]
  %v43 = vld [vmem:[%s0 + $0x8] sm:$0xf]
  %v44 = vld [vmem:[%s0 + $0xc] sm:$0xf]
  %v45 = vld [vmem:[%s3] sm:$0xff]
  %v46 = vld [vmem:[%s3 + $0x8] sm:$0xff]
  %v47 = vld [vmem:[%s3 + $0x10] sm:$0xff]
  %v48 = vld [vmem:[%s3 + $0x18] sm:$0xff]
  %v49 = vld [vmem:[%s3 + $0x20] sm:$0xff]
  %v50 = vld [vmem:[%s3 + $0x28] sm:$0xff]
  %v51 = vld [vmem:[%s3 + $0x30] sm:$0xff]
  %v52 = vld [vmem:[%s3 + $0x38] sm:$0xff]
  %v53 = vld [vmem:[%s3 + $0x40] sm:$0xff]
  %v54 = vld [vmem:[%s3 + $0x48] sm:$0xff]
  %v55 = vld [vmem:[%s3 + $0x50] sm:$0xff]
  %v56 = vld [vmem:[%s3 + $0x58] sm:$0xff]
  %v57 = vld [vmem:[%s3 + $0x60] sm:$0xff]
  %v58 = vld [vmem:[%s3 + $0x68] sm:$0xff]
  %v59 = vld [vmem:[%s3 + $0x70] sm:$0xff]
  %v60 = vld [vmem:[%s3 + $0x78] sm:$0xff]
  %v61 = vld [vmem:[%s1] sm:$0xff]
  %v62 = vld [vmem:[%s1 + $0x8] sm:$0xff]
  %v63 = vld [vmem:[%s1 + $0x10] sm:$0xff]
  %v64 = vld [vmem:[%s1 + $0x18] sm:$0xff]
  %vm65 = vcmp.eq.f32.partialorder %v61, 1.0
  %vm66 = vcmp.eq.f32.partialorder %v62, 1.0
  %vm67 = vcmp.eq.f32.partialorder %v63, 1.0
  %vm68 = vcmp.eq.f32.partialorder %v64, 1.0
  %v69 = vsel %vm65, 1, 0
  %v70 = vsel %vm66, 1, 0
  %v71 = vsel %vm67, 1, 0
  %v72 = vsel %vm68, 1, 0
  %73 = vset.pattern.permute.xlu0 0
  %74 = vperm.xlu0 %73, %v69
  %v75 = vpop.permute.xlu0 %74
  %76 = vset.pattern.permute.xlu0 0
  %77 = vperm.xlu0 %76, %v70
  %v78 = vpop.permute.xlu0 %77
  %79 = vset.pattern.permute.xlu0 0
  %80 = vperm.xlu0 %79, %v71
  %v81 = vpop.permute.xlu0 %80
  %82 = vset.pattern.permute.xlu0 0
  %83 = vperm.xlu0 %82, %v72
  %v84 = vpop.permute.xlu0 %83
  %vm85 = vcmp.eq.s32.totalorder %v75, 1
  %vm86 = vcmp.eq.s32.totalorder %v78, 1
  %vm87 = vcmp.eq.s32.totalorder %v81, 1
  %vm88 = vcmp.eq.s32.totalorder %v84, 1
  %vm89 = vcmp.eq.f32.partialorder %v61, 2.0
  %vm90 = vcmp.eq.f32.partialorder %v62, 2.0
  %vm91 = vcmp.eq.f32.partialorder %v63, 2.0
  %vm92 = vcmp.eq.f32.partialorder %v64, 2.0
  %v93 = vsel %vm89, 1, 0
  %v94 = vsel %vm90, 1, 0
  %v95 = vsel %vm91, 1, 0
  %v96 = vsel %vm92, 1, 0
  %97 = vset.pattern.permute.xlu0 0
  %98 = vperm.xlu0 %97, %v93
  %v99 = vpop.permute.xlu0 %98
  %100 = vset.pattern.permute.xlu0 0
  %101 = vperm.xlu0 %100, %v94
  %v102 = vpop.permute.xlu0 %101
  %103 = vset.pattern.permute.xlu0 0
  %104 = vperm.xlu0 %103, %v95
  %v105 = vpop.permute.xlu0 %104
  %106 = vset.pattern.permute.xlu0 0
  %107 = vperm.xlu0 %106, %v96
  %v108 = vpop.permute.xlu0 %107
  %vm109 = vcmp.eq.s32.totalorder %v99, 1
  %vm110 = vcmp.eq.s32.totalorder %v102, 1
  %vm111 = vcmp.eq.s32.totalorder %v105, 1
  %vm112 = vcmp.eq.s32.totalorder %v108, 1
  %vm113 = vcmp.eq.f32.partialorder %v61, 3.0
  %vm114 = vcmp.eq.f32.partialorder %v62, 3.0
  %vm115 = vcmp.eq.f32.partialorder %v63, 3.0
  %vm116 = vcmp.eq.f32.partialorder %v64, 3.0
  %v117 = vsel %vm113, 1, 0
  %v118 = vsel %vm114, 1, 0
  %v119 = vsel %vm115, 1, 0
  %v120 = vsel %vm116, 1, 0
  %121 = vset.pattern.permute.xlu0 0
  %122 = vperm.xlu0 %121, %v117
  %v123 = vpop.permute.xlu0 %122
  %124 = vset.pattern.permute.xlu0 0
  %125 = vperm.xlu0 %124, %v118
  %v126 = vpop.permute.xlu0 %125
  %127 = vset.pattern.permute.xlu0 0
  %128 = vperm.xlu0 %127, %v119
  %v129 = vpop.permute.xlu0 %128
  %130 = vset.pattern.permute.xlu0 0
  %131 = vperm.xlu0 %130, %v120
  %v132 = vpop.permute.xlu0 %131
  %vm133 = vcmp.eq.s32.totalorder %v123, 1
  %vm134 = vcmp.eq.s32.totalorder %v126, 1
  %vm135 = vcmp.eq.s32.totalorder %v129, 1
  %vm136 = vcmp.eq.s32.totalorder %v132, 1
  %v137 = vld [vmem:[%s4] sm:$0xff]
  %v138 = vld [vmem:[%s4 + $0x8] sm:$0xff]
  %v139 = vld [vmem:[%s4 + $0x10] sm:$0xff]
  %v140 = vld [vmem:[%s4 + $0x18] sm:$0xff]
  %v141 = vld [vmem:[%s2] sm:$0xff]
  %v142 = vld [vmem:[%s2 + $0x8] sm:$0xff]
  %v143 = vld [vmem:[%s2 + $0x10] sm:$0xff]
  %v144 = vld [vmem:[%s2 + $0x18] sm:$0xff]
  %v145 = vpack.c.bf16 %v142, %v141
  %v146 = vpack.c.bf16 %v144, %v143
  %v151 = vunpack.c.l.b16 %v41
  %v152 = vunpack.c.l.b16 %v42
  %v153 = vunpack.c.l.b16 %v43
  %v154 = vunpack.c.l.b16 %v44
  %v155 = vpack.c.b16 %v152, %v151
  %v156 = vpack.c.b16 %v154, %v153
  %vm157 = vcmask 261120
  %v159 = vsel %vm157, %v155, 0
  %v162 = vsel %vm157, %v156, 0
  %164 = vmatprep.subr.bf16.mxu0 0
  %165 = vmatpush1.bf16.msra.mxu0 0
  %166 = vmatprep.subr.bf16.mxu0 0
  %167 = vmatpush1.bf16.msra.mxu0 0
  %168 = vmatprep.subr.bf16.mxu0 0
  %169 = vmatpush1.bf16.msra.mxu0 0
  %170 = vmatprep.subr.bf16.mxu0 0
  %171 = vmatpush1.bf16.msra.mxu0 0
  %172 = vmatprep.subr.bf16.mxu0 0
  %173 = vmatpush1.bf16.msra.mxu0 0
  %174 = vmatprep.subr.bf16.mxu0 0
  %175 = vmatpush1.bf16.msra.mxu0 0
  %176 = vmatprep.subr.bf16.mxu0 0
  %177 = vmatpush1.bf16.msra.mxu0 %v146
  %178 = vmatprep.subr.bf16.mxu0 0
  %179 = vmatpush1.bf16.msra.mxu0 %v145
  %180 = vmatprep.subr.bf16.mxu0 0
  %181 = vmatpush2.bf16.msra.mxu0 0
  %182 = vmatprep.subr.bf16.mxu0 0
  %183 = vmatpush2.bf16.msra.mxu0 0
  %184 = vmatprep.subr.bf16.mxu0 0
  %185 = vmatpush2.bf16.msra.mxu0 0
  %186 = vmatprep.subr.bf16.mxu0 0
  %187 = vmatpush2.bf16.msra.mxu0 0
  %188 = vmatprep.subr.bf16.mxu0 0
  %189 = vmatpush2.bf16.msra.mxu0 0
  %190 = vmatprep.subr.bf16.mxu0 0
  %191 = vmatpush2.bf16.msra.mxu0 0
  %192 = vmatprep.subr.bf16.mxu0 0
  %193 = vmatpush2.bf16.msra.mxu0 0
  %194 = vmatprep.subr.bf16.mxu0 0
  %195 = vmatpush2.bf16.msra.mxu0 0
  %196 = vmatprep.mubr.bf16.mxu0 0
  %197 = vmatmul.mubr.bf16.gmra.mxu0 %v159
  %v198 = vpop.f32.mrf.mxu0
  %v199 = vadd.f32 0.0, %v198
  %v200 = vpop.f32.mrf.mxu0
  %v201 = vpop.f32.mrf.mxu0
  %v202 = vadd.f32 0.0, %v201
  %v203 = vpop.f32.mrf.mxu0
  %204 = vmatprep.mubr.bf16.mxu0 0
  %205 = vmatmul.mubr.bf16.gmra.mxu0 %v162
  %v206 = vpop.f32.mrf.mxu0
  %v207 = vadd.f32 0.0, %v206
  %v208 = vpop.f32.mrf.mxu0
  %v209 = vpop.f32.mrf.mxu0
  %v210 = vadd.f32 0.0, %v209
  %v211 = vpop.f32.mrf.mxu0
  %212 = vdwg.mxu0
  %v213 = vpack.c.bf16 %v202, %v199
  %v214 = vpack.c.bf16 %v210, %v207
  %217 = vrot.lane.b32.xlu0 %v145, 32
  %v218 = vpop.permute.xlu0 %217
  %219 = vrot.lane.b32.xlu0 %v146, 32
  %v220 = vpop.permute.xlu0 %219
  %v223 = vsel %vm157, %v213, %v218
  %v226 = vsel %vm157, %v214, %v220
  %v243 = vunpack.c.l.b16 %v45
  %v244 = vunpack.c.h.b16 %v45
  %v245 = vunpack.c.l.b16 %v46
  %v246 = vunpack.c.h.b16 %v46
  %v247 = vunpack.c.l.b16 %v47
  %v248 = vunpack.c.h.b16 %v47
  %v249 = vunpack.c.l.b16 %v48
  %v250 = vunpack.c.h.b16 %v48
  %v251 = vunpack.c.l.b16 %v49
  %v252 = vunpack.c.h.b16 %v49
  %v253 = vunpack.c.l.b16 %v50
  %v254 = vunpack.c.h.b16 %v50
  %v255 = vunpack.c.l.b16 %v51
  %v256 = vunpack.c.h.b16 %v51
  %v257 = vunpack.c.l.b16 %v52
  %v258 = vunpack.c.h.b16 %v52
  %v259 = vunpack.c.l.b16 %v53
  %v260 = vunpack.c.h.b16 %v53
  %v261 = vunpack.c.l.b16 %v54
  %v262 = vunpack.c.h.b16 %v54
  %v263 = vunpack.c.l.b16 %v55
  %v264 = vunpack.c.h.b16 %v55
  %v265 = vunpack.c.l.b16 %v56
  %v266 = vunpack.c.h.b16 %v56
  %v267 = vunpack.c.l.b16 %v57
  %v268 = vunpack.c.h.b16 %v57
  %v269 = vunpack.c.l.b16 %v58
  %v270 = vunpack.c.h.b16 %v58
  %v271 = vunpack.c.l.b16 %v59
  %v272 = vunpack.c.h.b16 %v59
  %v273 = vunpack.c.l.b16 %v60
  %v274 = vunpack.c.h.b16 %v60
  %v275 = vpack.c.b16 %v247, %v243
  %v276 = vpack.c.b16 %v248, %v244
  %v277 = vpack.c.b16 %v249, %v245
  %v278 = vpack.c.b16 %v250, %v246
  %v279 = vpack.c.b16 %v255, %v251
  %v280 = vpack.c.b16 %v256, %v252
  %v281 = vpack.c.b16 %v257, %v253
  %v282 = vpack.c.b16 %v258, %v254
  %v283 = vpack.c.b16 %v263, %v259
  %v284 = vpack.c.b16 %v264, %v260
  %v285 = vpack.c.b16 %v265, %v261
  %v286 = vpack.c.b16 %v266, %v262
  %v287 = vpack.c.b16 %v271, %v267
  %v288 = vpack.c.b16 %v272, %v268
  %v289 = vpack.c.b16 %v273, %v269
  %v290 = vpack.c.b16 %v274, %v270
  %vm307 = vcmask 523264
  %v308 = vsel %vm307, %v223, 0
  %v310 = vsel %vm307, %v226, 0
  %312 = vmatprep.subr.bf16.mxu0 0
  %313 = vmatpush1.bf16.msra.mxu0 0
  %314 = vmatprep.subr.bf16.mxu0 0
  %315 = vmatpush1.bf16.msra.mxu0 0
  %316 = vmatprep.subr.bf16.mxu0 0
  %317 = vmatpush1.bf16.msra.mxu0 0
  %318 = vmatprep.subr.bf16.mxu0 0
  %319 = vmatpush1.bf16.msra.mxu0 0
  %320 = vmatprep.subr.bf16.mxu0 %v288
  %321 = vmatpush1.bf16.msra.mxu0 %v287
  %322 = vmatprep.subr.bf16.mxu0 %v284
  %323 = vmatpush1.bf16.msra.mxu0 %v283
  %324 = vmatprep.subr.bf16.mxu0 %v280
  %325 = vmatpush1.bf16.msra.mxu0 %v279
  %326 = vmatprep.subr.bf16.mxu0 %v276
  %327 = vmatpush1.bf16.msra.mxu0 %v275
  %328 = vmatprep.subr.bf16.mxu0 0
  %329 = vmatpush2.bf16.msra.mxu0 0
  %330 = vmatprep.subr.bf16.mxu0 0
  %331 = vmatpush2.bf16.msra.mxu0 0
  %332 = vmatprep.subr.bf16.mxu0 0
  %333 = vmatpush2.bf16.msra.mxu0 0
  %334 = vmatprep.subr.bf16.mxu0 0
  %335 = vmatpush2.bf16.msra.mxu0 0
  %336 = vmatprep.subr.bf16.mxu0 0
  %337 = vmatpush2.bf16.msra.mxu0 0
  %338 = vmatprep.subr.bf16.mxu0 0
  %339 = vmatpush2.bf16.msra.mxu0 0
  %340 = vmatprep.subr.bf16.mxu0 0
  %341 = vmatpush2.bf16.msra.mxu0 0
  %342 = vmatprep.subr.bf16.mxu0 0
  %343 = vmatpush2.bf16.msra.mxu0 0
  %344 = vmatprep.mubr.bf16.mxu0 0
  %345 = vmatmul.mubr.bf16.gmra.mxu0 %v308
  %v346 = vpop.f32.mrf.mxu0
  %v347 = vadd.f32 0.0, %v346
  %v348 = vpop.f32.mrf.mxu0
  %v349 = vadd.f32 0.0, %v348
  %v350 = vpop.f32.mrf.mxu0
  %v351 = vadd.f32 0.0, %v350
  %v352 = vpop.f32.mrf.mxu0
  %v353 = vadd.f32 0.0, %v352
  %354 = vmatprep.mubr.bf16.mxu0 0
  %355 = vmatmul.mubr.bf16.gmra.mxu0 %v310
  %v356 = vpop.f32.mrf.mxu0
  %v357 = vadd.f32 0.0, %v356
  %v358 = vpop.f32.mrf.mxu0
  %v359 = vadd.f32 0.0, %v358
  %v360 = vpop.f32.mrf.mxu0
  %v361 = vadd.f32 0.0, %v360
  %v362 = vpop.f32.mrf.mxu0
  %v363 = vadd.f32 0.0, %v362
  %364 = vdwg.mxu0
  %365 = vmatprep.subr.bf16.mxu0 0
  %366 = vmatpush1.bf16.msra.mxu0 0
  %367 = vmatprep.subr.bf16.mxu0 0
  %368 = vmatpush1.bf16.msra.mxu0 0
  %369 = vmatprep.subr.bf16.mxu0 0
  %370 = vmatpush1.bf16.msra.mxu0 0
  %371 = vmatprep.subr.bf16.mxu0 0
  %372 = vmatpush1.bf16.msra.mxu0 0
  %373 = vmatprep.subr.bf16.mxu0 %v290
  %374 = vmatpush1.bf16.msra.mxu0 %v289
  %375 = vmatprep.subr.bf16.mxu0 %v286
  %376 = vmatpush1.bf16.msra.mxu0 %v285
  %377 = vmatprep.subr.bf16.mxu0 %v282
  %378 = vmatpush1.bf16.msra.mxu0 %v281
  %379 = vmatprep.subr.bf16.mxu0 %v278
  %380 = vmatpush1.bf16.msra.mxu0 %v277
  %381 = vmatprep.subr.bf16.mxu0 0
  %382 = vmatpush2.bf16.msra.mxu0 0
  %383 = vmatprep.subr.bf16.mxu0 0
  %384 = vmatpush2.bf16.msra.mxu0 0
  %385 = vmatprep.subr.bf16.mxu0 0
  %386 = vmatpush2.bf16.msra.mxu0 0
  %387 = vmatprep.subr.bf16.mxu0 0
  %388 = vmatpush2.bf16.msra.mxu0 0
  %389 = vmatprep.subr.bf16.mxu0 0
  %390 = vmatpush2.bf16.msra.mxu0 0
  %391 = vmatprep.subr.bf16.mxu0 0
  %392 = vmatpush2.bf16.msra.mxu0 0
  %393 = vmatprep.subr.bf16.mxu0 0
  %394 = vmatpush2.bf16.msra.mxu0 0
  %395 = vmatprep.subr.bf16.mxu0 0
  %396 = vmatpush2.bf16.msra.mxu0 0
  %397 = vmatprep.mubr.bf16.mxu0 0
  %398 = vmatmul.mubr.bf16.gmra.mxu0 %v308
  %v399 = vpop.f32.mrf.mxu0
  %v400 = vadd.f32 0.0, %v399
  %v401 = vpop.f32.mrf.mxu0
  %v402 = vadd.f32 0.0, %v401
  %v403 = vpop.f32.mrf.mxu0
  %v404 = vadd.f32 0.0, %v403
  %v405 = vpop.f32.mrf.mxu0
  %v406 = vadd.f32 0.0, %v405
  %407 = vmatprep.mubr.bf16.mxu0 0
  %408 = vmatmul.mubr.bf16.gmra.mxu0 %v310
  %v409 = vpop.f32.mrf.mxu0
  %v410 = vadd.f32 0.0, %v409
  %v411 = vpop.f32.mrf.mxu0
  %v412 = vadd.f32 0.0, %v411
  %v413 = vpop.f32.mrf.mxu0
  %v414 = vadd.f32 0.0, %v413
  %v415 = vpop.f32.mrf.mxu0
  %v416 = vadd.f32 0.0, %v415
  %417 = vdwg.mxu0
  %v418 = vadd.f32 %v347, %v137
  %v419 = vadd.f32 %v351, %v138
  %v420 = vadd.f32 %v357, %v139
  %v421 = vadd.f32 %v361, %v140
  %v422 = vxor.u32 %v418, 2147483648
  %v423 = vxor.u32 %v419, 2147483648
  %v424 = vxor.u32 %v420, 2147483648
  %v425 = vxor.u32 %v421, 2147483648
  %v426 = vmul.f32 %v422, 1.442695
  %v427 = vpow.pop %v426
  %v428 = vmul.f32 %v423, 1.442695
  %v429 = vpow.pop %v428
  %v430 = vmul.f32 %v424, 1.442695
  %v431 = vpow.pop %v430
  %v432 = vmul.f32 %v425, 1.442695
  %v433 = vpow.pop %v432
  %v434 = vadd.f32 %v427, 1.0
  %v435 = vadd.f32 %v429, 1.0
  %v436 = vadd.f32 %v431, 1.0
  %v437 = vadd.f32 %v433, 1.0
  %v438 = vrcp.pop %v434
  %v439 = vmul.f32 1.0, %v438
  %v440 = vrcp.pop %v435
  %v441 = vmul.f32 1.0, %v440
  %v442 = vrcp.pop %v436
  %v443 = vmul.f32 1.0, %v442
  %v444 = vrcp.pop %v437
  %v445 = vmul.f32 1.0, %v444
  %450 = vrot.lane.b32.xlu0 %v137, 96
  %v451 = vpop.permute.xlu0 %450
  %452 = vrot.lane.b32.xlu0 %v138, 96
  %v453 = vpop.permute.xlu0 %452
  %454 = vrot.lane.b32.xlu0 %v139, 96
  %v455 = vpop.permute.xlu0 %454
  %456 = vrot.lane.b32.xlu0 %v140, 96
  %v457 = vpop.permute.xlu0 %456
  %v462 = vadd.f32 %v349, %v451
  %v463 = vadd.f32 %v353, %v453
  %v464 = vadd.f32 %v359, %v455
  %v465 = vadd.f32 %v363, %v457
  %v466 = vxor.u32 %v462, 2147483648
  %v467 = vxor.u32 %v463, 2147483648
  %v468 = vxor.u32 %v464, 2147483648
  %v469 = vxor.u32 %v465, 2147483648
  %v470 = vmul.f32 %v466, 1.442695
  %v471 = vpow.pop %v470
  %v472 = vmul.f32 %v467, 1.442695
  %v473 = vpow.pop %v472
  %v474 = vmul.f32 %v468, 1.442695
  %v475 = vpow.pop %v474
  %v476 = vmul.f32 %v469, 1.442695
  %v477 = vpow.pop %v476
  %v478 = vadd.f32 %v471, 1.0
  %v479 = vadd.f32 %v473, 1.0
  %v480 = vadd.f32 %v475, 1.0
  %v481 = vadd.f32 %v477, 1.0
  %v482 = vrcp.pop %v478
  %v483 = vmul.f32 1.0, %v482
  %v484 = vrcp.pop %v479
  %v485 = vmul.f32 1.0, %v484
  %v486 = vrcp.pop %v480
  %v487 = vmul.f32 1.0, %v486
  %v488 = vrcp.pop %v481
  %v489 = vmul.f32 1.0, %v488
  %490 = vrot.lane.b32.xlu0 %v137, 64
  %v491 = vpop.permute.xlu0 %490
  %492 = vrot.lane.b32.xlu0 %v138, 64
  %v493 = vpop.permute.xlu0 %492
  %494 = vrot.lane.b32.xlu0 %v139, 64
  %v495 = vpop.permute.xlu0 %494
  %496 = vrot.lane.b32.xlu0 %v140, 64
  %v497 = vpop.permute.xlu0 %496
  %v502 = vadd.f32 %v400, %v491
  %v503 = vadd.f32 %v404, %v493
  %v504 = vadd.f32 %v410, %v495
  %v505 = vadd.f32 %v414, %v497
  %506 = vrot.lane.b32.xlu0 %v137, 32
  %v507 = vpop.permute.xlu0 %506
  %508 = vrot.lane.b32.xlu0 %v138, 32
  %v509 = vpop.permute.xlu0 %508
  %510 = vrot.lane.b32.xlu0 %v139, 32
  %v511 = vpop.permute.xlu0 %510
  %512 = vrot.lane.b32.xlu0 %v140, 32
  %v513 = vpop.permute.xlu0 %512
  %v518 = vadd.f32 %v402, %v507
  %v519 = vadd.f32 %v406, %v509
  %v520 = vadd.f32 %v412, %v511
  %v521 = vadd.f32 %v416, %v513
  %v522 = vmul.f32 %v439, %v518
  %v523 = vmul.f32 %v441, %v519
  %v524 = vmul.f32 %v443, %v520
  %v525 = vmul.f32 %v445, %v521
  %v526 = vadd.f32 %v502, %v522
  %v527 = vadd.f32 %v503, %v523
  %v528 = vadd.f32 %v504, %v524
  %v529 = vadd.f32 %v505, %v525
  %v530 = vtanh.pop %v526
  %v531 = vtanh.pop %v527
  %v532 = vtanh.pop %v528
  %v533 = vtanh.pop %v529
  %v534 = vsub.f32 1.0, %v483
  %v535 = vsub.f32 1.0, %v485
  %v536 = vsub.f32 1.0, %v487
  %v537 = vsub.f32 1.0, %v489
  %v538 = vmul.f32 %v534, %v530
  %v539 = vmul.f32 %v535, %v531
  %v540 = vmul.f32 %v536, %v532
  %v541 = vmul.f32 %v537, %v533
  %v542 = vmul.f32 %v483, %v141
  %v543 = vmul.f32 %v485, %v142
  %v544 = vmul.f32 %v487, %v143
  %v545 = vmul.f32 %v489, %v144
  %v546 = vadd.f32 %v538, %v542
  %v547 = vadd.f32 %v539, %v543
  %v548 = vadd.f32 %v540, %v544
  %v549 = vadd.f32 %v541, %v545
  %v550 = vsel %vm85, %v546, %v141
  %v551 = vsel %vm86, %v547, %v142
  %v552 = vsel %vm87, %v548, %v143
  %v553 = vsel %vm88, %v549, %v144
  %v554 = vpack.c.bf16 %v551, %v550
  %v555 = vpack.c.bf16 %v553, %v552
  %556 = vmatprep.subr.bf16.mxu0 0
  %557 = vmatpush1.bf16.msra.mxu0 0
  %558 = vmatprep.subr.bf16.mxu0 0
  %559 = vmatpush1.bf16.msra.mxu0 0
  %560 = vmatprep.subr.bf16.mxu0 0
  %561 = vmatpush1.bf16.msra.mxu0 0
  %562 = vmatprep.subr.bf16.mxu0 0
  %563 = vmatpush1.bf16.msra.mxu0 0
  %564 = vmatprep.subr.bf16.mxu0 0
  %565 = vmatpush1.bf16.msra.mxu0 0
  %566 = vmatprep.subr.bf16.mxu0 0
  %567 = vmatpush1.bf16.msra.mxu0 0
  %568 = vmatprep.subr.bf16.mxu0 0
  %569 = vmatpush1.bf16.msra.mxu0 %v555
  %570 = vmatprep.subr.bf16.mxu0 0
  %571 = vmatpush1.bf16.msra.mxu0 %v554
  %572 = vmatprep.subr.bf16.mxu0 0
  %573 = vmatpush2.bf16.msra.mxu0 0
  %574 = vmatprep.subr.bf16.mxu0 0
  %575 = vmatpush2.bf16.msra.mxu0 0
  %576 = vmatprep.subr.bf16.mxu0 0
  %577 = vmatpush2.bf16.msra.mxu0 0
  %578 = vmatprep.subr.bf16.mxu0 0
  %579 = vmatpush2.bf16.msra.mxu0 0
  %580 = vmatprep.subr.bf16.mxu0 0
  %581 = vmatpush2.bf16.msra.mxu0 0
  %582 = vmatprep.subr.bf16.mxu0 0
  %583 = vmatpush2.bf16.msra.mxu0 0
  %584 = vmatprep.subr.bf16.mxu0 0
  %585 = vmatpush2.bf16.msra.mxu0 0
  %586 = vmatprep.subr.bf16.mxu0 0
  %587 = vmatpush2.bf16.msra.mxu0 0
  %588 = vmatprep.mubr.bf16.mxu0 0
  %589 = vmatmul.mubr.bf16.gmra.mxu0 %v159
  %v590 = vpop.f32.mrf.mxu0
  %v591 = vadd.f32 0.0, %v590
  %v592 = vpop.f32.mrf.mxu0
  %v593 = vpop.f32.mrf.mxu0
  %v594 = vadd.f32 0.0, %v593
  %v595 = vpop.f32.mrf.mxu0
  %596 = vmatprep.mubr.bf16.mxu0 0
  %597 = vmatmul.mubr.bf16.gmra.mxu0 %v162
  %v598 = vpop.f32.mrf.mxu0
  %v599 = vadd.f32 0.0, %v598
  %v600 = vpop.f32.mrf.mxu0
  %v601 = vpop.f32.mrf.mxu0
  %v602 = vadd.f32 0.0, %v601
  %v603 = vpop.f32.mrf.mxu0
  %604 = vdwg.mxu0
  %v605 = vpack.c.bf16 %v594, %v591
  %v606 = vpack.c.bf16 %v602, %v599
  %609 = vrot.lane.b32.xlu0 %v554, 32
  %v610 = vpop.permute.xlu0 %609
  %611 = vrot.lane.b32.xlu0 %v555, 32
  %v612 = vpop.permute.xlu0 %611
  %v615 = vsel %vm157, %v605, %v610
  %v618 = vsel %vm157, %v606, %v612
  %v619 = vsel %vm307, %v615, 0
  %v621 = vsel %vm307, %v618, 0
  %623 = vmatprep.subr.bf16.mxu0 0
  %624 = vmatpush1.bf16.msra.mxu0 0
  %625 = vmatprep.subr.bf16.mxu0 0
  %626 = vmatpush1.bf16.msra.mxu0 0
  %627 = vmatprep.subr.bf16.mxu0 0
  %628 = vmatpush1.bf16.msra.mxu0 0
  %629 = vmatprep.subr.bf16.mxu0 0
  %630 = vmatpush1.bf16.msra.mxu0 0
  %631 = vmatprep.subr.bf16.mxu0 %v288
  %632 = vmatpush1.bf16.msra.mxu0 %v287
  %633 = vmatprep.subr.bf16.mxu0 %v284
  %634 = vmatpush1.bf16.msra.mxu0 %v283
  %635 = vmatprep.subr.bf16.mxu0 %v280
  %636 = vmatpush1.bf16.msra.mxu0 %v279
  %637 = vmatprep.subr.bf16.mxu0 %v276
  %638 = vmatpush1.bf16.msra.mxu0 %v275
  %639 = vmatprep.subr.bf16.mxu0 0
  %640 = vmatpush2.bf16.msra.mxu0 0
  %641 = vmatprep.subr.bf16.mxu0 0
  %642 = vmatpush2.bf16.msra.mxu0 0
  %643 = vmatprep.subr.bf16.mxu0 0
  %644 = vmatpush2.bf16.msra.mxu0 0
  %645 = vmatprep.subr.bf16.mxu0 0
  %646 = vmatpush2.bf16.msra.mxu0 0
  %647 = vmatprep.subr.bf16.mxu0 0
  %648 = vmatpush2.bf16.msra.mxu0 0
  %649 = vmatprep.subr.bf16.mxu0 0
  %650 = vmatpush2.bf16.msra.mxu0 0
  %651 = vmatprep.subr.bf16.mxu0 0
  %652 = vmatpush2.bf16.msra.mxu0 0
  %653 = vmatprep.subr.bf16.mxu0 0
  %654 = vmatpush2.bf16.msra.mxu0 0
  %655 = vmatprep.mubr.bf16.mxu0 0
  %656 = vmatmul.mubr.bf16.gmra.mxu0 %v619
  %v657 = vpop.f32.mrf.mxu0
  %v658 = vadd.f32 0.0, %v657
  %v659 = vpop.f32.mrf.mxu0
  %v660 = vadd.f32 0.0, %v659
  %v661 = vpop.f32.mrf.mxu0
  %v662 = vadd.f32 0.0, %v661
  %v663 = vpop.f32.mrf.mxu0
  %v664 = vadd.f32 0.0, %v663
  %665 = vmatprep.mubr.bf16.mxu0 0
  %666 = vmatmul.mubr.bf16.gmra.mxu0 %v621
  %v667 = vpop.f32.mrf.mxu0
  %v668 = vadd.f32 0.0, %v667
  %v669 = vpop.f32.mrf.mxu0
  %v670 = vadd.f32 0.0, %v669
  %v671 = vpop.f32.mrf.mxu0
  %v672 = vadd.f32 0.0, %v671
  %v673 = vpop.f32.mrf.mxu0
  %v674 = vadd.f32 0.0, %v673
  %675 = vdwg.mxu0
  %676 = vmatprep.subr.bf16.mxu0 0
  %677 = vmatpush1.bf16.msra.mxu0 0
  %678 = vmatprep.subr.bf16.mxu0 0
  %679 = vmatpush1.bf16.msra.mxu0 0
  %680 = vmatprep.subr.bf16.mxu0 0
  %681 = vmatpush1.bf16.msra.mxu0 0
  %682 = vmatprep.subr.bf16.mxu0 0
  %683 = vmatpush1.bf16.msra.mxu0 0
  %684 = vmatprep.subr.bf16.mxu0 %v290
  %685 = vmatpush1.bf16.msra.mxu0 %v289
  %686 = vmatprep.subr.bf16.mxu0 %v286
  %687 = vmatpush1.bf16.msra.mxu0 %v285
  %688 = vmatprep.subr.bf16.mxu0 %v282
  %689 = vmatpush1.bf16.msra.mxu0 %v281
  %690 = vmatprep.subr.bf16.mxu0 %v278
  %691 = vmatpush1.bf16.msra.mxu0 %v277
  %692 = vmatprep.subr.bf16.mxu0 0
  %693 = vmatpush2.bf16.msra.mxu0 0
  %694 = vmatprep.subr.bf16.mxu0 0
  %695 = vmatpush2.bf16.msra.mxu0 0
  %696 = vmatprep.subr.bf16.mxu0 0
  %697 = vmatpush2.bf16.msra.mxu0 0
  %698 = vmatprep.subr.bf16.mxu0 0
  %699 = vmatpush2.bf16.msra.mxu0 0
  %700 = vmatprep.subr.bf16.mxu0 0
  %701 = vmatpush2.bf16.msra.mxu0 0
  %702 = vmatprep.subr.bf16.mxu0 0
  %703 = vmatpush2.bf16.msra.mxu0 0
  %704 = vmatprep.subr.bf16.mxu0 0
  %705 = vmatpush2.bf16.msra.mxu0 0
  %706 = vmatprep.subr.bf16.mxu0 0
  %707 = vmatpush2.bf16.msra.mxu0 0
  %708 = vmatprep.mubr.bf16.mxu0 0
  %709 = vmatmul.mubr.bf16.gmra.mxu0 %v619
  %v710 = vpop.f32.mrf.mxu0
  %v711 = vadd.f32 0.0, %v710
  %v712 = vpop.f32.mrf.mxu0
  %v713 = vadd.f32 0.0, %v712
  %v714 = vpop.f32.mrf.mxu0
  %v715 = vadd.f32 0.0, %v714
  %v716 = vpop.f32.mrf.mxu0
  %v717 = vadd.f32 0.0, %v716
  %718 = vmatprep.mubr.bf16.mxu0 0
  %719 = vmatmul.mubr.bf16.gmra.mxu0 %v621
  %v720 = vpop.f32.mrf.mxu0
  %v721 = vadd.f32 0.0, %v720
  %v722 = vpop.f32.mrf.mxu0
  %v723 = vadd.f32 0.0, %v722
  %v724 = vpop.f32.mrf.mxu0
  %v725 = vadd.f32 0.0, %v724
  %v726 = vpop.f32.mrf.mxu0
  %v727 = vadd.f32 0.0, %v726
  %728 = vdwg.mxu0
  %v729 = vadd.f32 %v658, %v137
  %v730 = vadd.f32 %v662, %v138
  %v731 = vadd.f32 %v668, %v139
  %v732 = vadd.f32 %v672, %v140
  %v733 = vxor.u32 %v729, 2147483648
  %v734 = vxor.u32 %v730, 2147483648
  %v735 = vxor.u32 %v731, 2147483648
  %v736 = vxor.u32 %v732, 2147483648
  %v737 = vmul.f32 %v733, 1.442695
  %v738 = vpow.pop %v737
  %v739 = vmul.f32 %v734, 1.442695
  %v740 = vpow.pop %v739
  %v741 = vmul.f32 %v735, 1.442695
  %v742 = vpow.pop %v741
  %v743 = vmul.f32 %v736, 1.442695
  %v744 = vpow.pop %v743
  %v745 = vadd.f32 %v738, 1.0
  %v746 = vadd.f32 %v740, 1.0
  %v747 = vadd.f32 %v742, 1.0
  %v748 = vadd.f32 %v744, 1.0
  %v749 = vrcp.pop %v745
  %v750 = vmul.f32 1.0, %v749
  %v751 = vrcp.pop %v746
  %v752 = vmul.f32 1.0, %v751
  %v753 = vrcp.pop %v747
  %v754 = vmul.f32 1.0, %v753
  %v755 = vrcp.pop %v748
  %v756 = vmul.f32 1.0, %v755
  %v757 = vadd.f32 %v660, %v451
  %v758 = vadd.f32 %v664, %v453
  %v759 = vadd.f32 %v670, %v455
  %v760 = vadd.f32 %v674, %v457
  %v761 = vxor.u32 %v757, 2147483648
  %v762 = vxor.u32 %v758, 2147483648
  %v763 = vxor.u32 %v759, 2147483648
  %v764 = vxor.u32 %v760, 2147483648
  %v765 = vmul.f32 %v761, 1.442695
  %v766 = vpow.pop %v765
  %v767 = vmul.f32 %v762, 1.442695
  %v768 = vpow.pop %v767
  %v769 = vmul.f32 %v763, 1.442695
  %v770 = vpow.pop %v769
  %v771 = vmul.f32 %v764, 1.442695
  %v772 = vpow.pop %v771
  %v773 = vadd.f32 %v766, 1.0
  %v774 = vadd.f32 %v768, 1.0
  %v775 = vadd.f32 %v770, 1.0
  %v776 = vadd.f32 %v772, 1.0
  %v777 = vrcp.pop %v773
  %v778 = vmul.f32 1.0, %v777
  %v779 = vrcp.pop %v774
  %v780 = vmul.f32 1.0, %v779
  %v781 = vrcp.pop %v775
  %v782 = vmul.f32 1.0, %v781
  %v783 = vrcp.pop %v776
  %v784 = vmul.f32 1.0, %v783
  %v785 = vadd.f32 %v711, %v491
  %v786 = vadd.f32 %v715, %v493
  %v787 = vadd.f32 %v721, %v495
  %v788 = vadd.f32 %v725, %v497
  %v789 = vadd.f32 %v713, %v507
  %v790 = vadd.f32 %v717, %v509
  %v791 = vadd.f32 %v723, %v511
  %v792 = vadd.f32 %v727, %v513
  %v793 = vmul.f32 %v750, %v789
  %v794 = vmul.f32 %v752, %v790
  %v795 = vmul.f32 %v754, %v791
  %v796 = vmul.f32 %v756, %v792
  %v797 = vadd.f32 %v785, %v793
  %v798 = vadd.f32 %v786, %v794
  %v799 = vadd.f32 %v787, %v795
  %v800 = vadd.f32 %v788, %v796
  %v801 = vtanh.pop %v797
  %v802 = vtanh.pop %v798
  %v803 = vtanh.pop %v799
  %v804 = vtanh.pop %v800
  %v805 = vsub.f32 1.0, %v778
  %v806 = vsub.f32 1.0, %v780
  %v807 = vsub.f32 1.0, %v782
  %v808 = vsub.f32 1.0, %v784
  %v809 = vmul.f32 %v805, %v801
  %v810 = vmul.f32 %v806, %v802
  %v811 = vmul.f32 %v807, %v803
  %v812 = vmul.f32 %v808, %v804
  %v813 = vmul.f32 %v778, %v550
  %v814 = vmul.f32 %v780, %v551
  %v815 = vmul.f32 %v782, %v552
  %v816 = vmul.f32 %v784, %v553
  %v817 = vadd.f32 %v809, %v813
  %v818 = vadd.f32 %v810, %v814
  %v819 = vadd.f32 %v811, %v815
  %v820 = vadd.f32 %v812, %v816
  %v821 = vsel %vm109, %v817, %v550
  %v822 = vsel %vm110, %v818, %v551
  %v823 = vsel %vm111, %v819, %v552
  %v824 = vsel %vm112, %v820, %v553
  %v825 = vpack.c.bf16 %v822, %v821
  %v826 = vpack.c.bf16 %v824, %v823
  %827 = vmatprep.subr.bf16.mxu0 0
  %828 = vmatpush1.bf16.msra.mxu0 0
  %829 = vmatprep.subr.bf16.mxu0 0
  %830 = vmatpush1.bf16.msra.mxu0 0
  %831 = vmatprep.subr.bf16.mxu0 0
  %832 = vmatpush1.bf16.msra.mxu0 0
  %833 = vmatprep.subr.bf16.mxu0 0
  %834 = vmatpush1.bf16.msra.mxu0 0
  %835 = vmatprep.subr.bf16.mxu0 0
  %836 = vmatpush1.bf16.msra.mxu0 0
  %837 = vmatprep.subr.bf16.mxu0 0
  %838 = vmatpush1.bf16.msra.mxu0 0
  %839 = vmatprep.subr.bf16.mxu0 0
  %840 = vmatpush1.bf16.msra.mxu0 %v826
  %841 = vmatprep.subr.bf16.mxu0 0
  %842 = vmatpush1.bf16.msra.mxu0 %v825
  %843 = vmatprep.subr.bf16.mxu0 0
  %844 = vmatpush2.bf16.msra.mxu0 0
  %845 = vmatprep.subr.bf16.mxu0 0
  %846 = vmatpush2.bf16.msra.mxu0 0
  %847 = vmatprep.subr.bf16.mxu0 0
  %848 = vmatpush2.bf16.msra.mxu0 0
  %849 = vmatprep.subr.bf16.mxu0 0
  %850 = vmatpush2.bf16.msra.mxu0 0
  %851 = vmatprep.subr.bf16.mxu0 0
  %852 = vmatpush2.bf16.msra.mxu0 0
  %853 = vmatprep.subr.bf16.mxu0 0
  %854 = vmatpush2.bf16.msra.mxu0 0
  %855 = vmatprep.subr.bf16.mxu0 0
  %856 = vmatpush2.bf16.msra.mxu0 0
  %857 = vmatprep.subr.bf16.mxu0 0
  %858 = vmatpush2.bf16.msra.mxu0 0
  %859 = vmatprep.mubr.bf16.mxu0 0
  %860 = vmatmul.mubr.bf16.gmra.mxu0 %v159
  %v861 = vpop.f32.mrf.mxu0
  %v862 = vadd.f32 0.0, %v861
  %v863 = vpop.f32.mrf.mxu0
  %v864 = vpop.f32.mrf.mxu0
  %v865 = vadd.f32 0.0, %v864
  %v866 = vpop.f32.mrf.mxu0
  %867 = vmatprep.mubr.bf16.mxu0 0
  %868 = vmatmul.mubr.bf16.gmra.mxu0 %v162
  %v869 = vpop.f32.mrf.mxu0
  %v870 = vadd.f32 0.0, %v869
  %v871 = vpop.f32.mrf.mxu0
  %v872 = vpop.f32.mrf.mxu0
  %v873 = vadd.f32 0.0, %v872
  %v874 = vpop.f32.mrf.mxu0
  %875 = vdwg.mxu0
  %v876 = vpack.c.bf16 %v865, %v862
  %v877 = vpack.c.bf16 %v873, %v870
  %880 = vrot.lane.b32.xlu0 %v825, 32
  %v881 = vpop.permute.xlu0 %880
  %882 = vrot.lane.b32.xlu0 %v826, 32
  %v883 = vpop.permute.xlu0 %882
  %v886 = vsel %vm157, %v876, %v881
  %v889 = vsel %vm157, %v877, %v883
  %v890 = vsel %vm307, %v886, 0
  %v892 = vsel %vm307, %v889, 0
  %894 = vmatprep.subr.bf16.mxu0 0
  %895 = vmatpush1.bf16.msra.mxu0 0
  %896 = vmatprep.subr.bf16.mxu0 0
  %897 = vmatpush1.bf16.msra.mxu0 0
  %898 = vmatprep.subr.bf16.mxu0 0
  %899 = vmatpush1.bf16.msra.mxu0 0
  %900 = vmatprep.subr.bf16.mxu0 0
  %901 = vmatpush1.bf16.msra.mxu0 0
  %902 = vmatprep.subr.bf16.mxu0 %v288
  %903 = vmatpush1.bf16.msra.mxu0 %v287
  %904 = vmatprep.subr.bf16.mxu0 %v284
  %905 = vmatpush1.bf16.msra.mxu0 %v283
  %906 = vmatprep.subr.bf16.mxu0 %v280
  %907 = vmatpush1.bf16.msra.mxu0 %v279
  %908 = vmatprep.subr.bf16.mxu0 %v276
  %909 = vmatpush1.bf16.msra.mxu0 %v275
  %910 = vmatprep.subr.bf16.mxu0 0
  %911 = vmatpush2.bf16.msra.mxu0 0
  %912 = vmatprep.subr.bf16.mxu0 0
  %913 = vmatpush2.bf16.msra.mxu0 0
  %914 = vmatprep.subr.bf16.mxu0 0
  %915 = vmatpush2.bf16.msra.mxu0 0
  %916 = vmatprep.subr.bf16.mxu0 0
  %917 = vmatpush2.bf16.msra.mxu0 0
  %918 = vmatprep.subr.bf16.mxu0 0
  %919 = vmatpush2.bf16.msra.mxu0 0
  %920 = vmatprep.subr.bf16.mxu0 0
  %921 = vmatpush2.bf16.msra.mxu0 0
  %922 = vmatprep.subr.bf16.mxu0 0
  %923 = vmatpush2.bf16.msra.mxu0 0
  %924 = vmatprep.subr.bf16.mxu0 0
  %925 = vmatpush2.bf16.msra.mxu0 0
  %926 = vmatprep.mubr.bf16.mxu0 0
  %927 = vmatmul.mubr.bf16.gmra.mxu0 %v890
  %v928 = vpop.f32.mrf.mxu0
  %v929 = vadd.f32 0.0, %v928
  %v930 = vpop.f32.mrf.mxu0
  %v931 = vadd.f32 0.0, %v930
  %v932 = vpop.f32.mrf.mxu0
  %v933 = vadd.f32 0.0, %v932
  %v934 = vpop.f32.mrf.mxu0
  %v935 = vadd.f32 0.0, %v934
  %936 = vmatprep.mubr.bf16.mxu0 0
  %937 = vmatmul.mubr.bf16.gmra.mxu0 %v892
  %v938 = vpop.f32.mrf.mxu0
  %v939 = vadd.f32 0.0, %v938
  %v940 = vpop.f32.mrf.mxu0
  %v941 = vadd.f32 0.0, %v940
  %v942 = vpop.f32.mrf.mxu0
  %v943 = vadd.f32 0.0, %v942
  %v944 = vpop.f32.mrf.mxu0
  %v945 = vadd.f32 0.0, %v944
  %946 = vdwg.mxu0
  %947 = vmatprep.subr.bf16.mxu0 0
  %948 = vmatpush1.bf16.msra.mxu0 0
  %949 = vmatprep.subr.bf16.mxu0 0
  %950 = vmatpush1.bf16.msra.mxu0 0
  %951 = vmatprep.subr.bf16.mxu0 0
  %952 = vmatpush1.bf16.msra.mxu0 0
  %953 = vmatprep.subr.bf16.mxu0 0
  %954 = vmatpush1.bf16.msra.mxu0 0
  %955 = vmatprep.subr.bf16.mxu0 %v290
  %956 = vmatpush1.bf16.msra.mxu0 %v289
  %957 = vmatprep.subr.bf16.mxu0 %v286
  %958 = vmatpush1.bf16.msra.mxu0 %v285
  %959 = vmatprep.subr.bf16.mxu0 %v282
  %960 = vmatpush1.bf16.msra.mxu0 %v281
  %961 = vmatprep.subr.bf16.mxu0 %v278
  %962 = vmatpush1.bf16.msra.mxu0 %v277
  %963 = vmatprep.subr.bf16.mxu0 0
  %964 = vmatpush2.bf16.msra.mxu0 0
  %965 = vmatprep.subr.bf16.mxu0 0
  %966 = vmatpush2.bf16.msra.mxu0 0
  %967 = vmatprep.subr.bf16.mxu0 0
  %968 = vmatpush2.bf16.msra.mxu0 0
  %969 = vmatprep.subr.bf16.mxu0 0
  %970 = vmatpush2.bf16.msra.mxu0 0
  %971 = vmatprep.subr.bf16.mxu0 0
  %972 = vmatpush2.bf16.msra.mxu0 0
  %973 = vmatprep.subr.bf16.mxu0 0
  %974 = vmatpush2.bf16.msra.mxu0 0
  %975 = vmatprep.subr.bf16.mxu0 0
  %976 = vmatpush2.bf16.msra.mxu0 0
  %977 = vmatprep.subr.bf16.mxu0 0
  %978 = vmatpush2.bf16.msra.mxu0 0
  %979 = vmatprep.mubr.bf16.mxu0 0
  %980 = vmatmul.mubr.bf16.gmra.mxu0 %v890
  %v981 = vpop.f32.mrf.mxu0
  %v982 = vadd.f32 0.0, %v981
  %v983 = vpop.f32.mrf.mxu0
  %v984 = vadd.f32 0.0, %v983
  %v985 = vpop.f32.mrf.mxu0
  %v986 = vadd.f32 0.0, %v985
  %v987 = vpop.f32.mrf.mxu0
  %v988 = vadd.f32 0.0, %v987
  %989 = vmatprep.mubr.bf16.mxu0 0
  %990 = vmatmul.mubr.bf16.gmra.mxu0 %v892
  %v991 = vpop.f32.mrf.mxu0
  %v992 = vadd.f32 0.0, %v991
  %v993 = vpop.f32.mrf.mxu0
  %v994 = vadd.f32 0.0, %v993
  %v995 = vpop.f32.mrf.mxu0
  %v996 = vadd.f32 0.0, %v995
  %v997 = vpop.f32.mrf.mxu0
  %v998 = vadd.f32 0.0, %v997
  %999 = vdwg.mxu0
  %v1000 = vadd.f32 %v929, %v137
  %v1001 = vadd.f32 %v933, %v138
  %v1002 = vadd.f32 %v939, %v139
  %v1003 = vadd.f32 %v943, %v140
  %v1004 = vxor.u32 %v1000, 2147483648
  %v1005 = vxor.u32 %v1001, 2147483648
  %v1006 = vxor.u32 %v1002, 2147483648
  %v1007 = vxor.u32 %v1003, 2147483648
  %v1008 = vmul.f32 %v1004, 1.442695
  %v1009 = vpow.pop %v1008
  %v1010 = vmul.f32 %v1005, 1.442695
  %v1011 = vpow.pop %v1010
  %v1012 = vmul.f32 %v1006, 1.442695
  %v1013 = vpow.pop %v1012
  %v1014 = vmul.f32 %v1007, 1.442695
  %v1015 = vpow.pop %v1014
  %v1016 = vadd.f32 %v1009, 1.0
  %v1017 = vadd.f32 %v1011, 1.0
  %v1018 = vadd.f32 %v1013, 1.0
  %v1019 = vadd.f32 %v1015, 1.0
  %v1020 = vrcp.pop %v1016
  %v1021 = vmul.f32 1.0, %v1020
  %v1022 = vrcp.pop %v1017
  %v1023 = vmul.f32 1.0, %v1022
  %v1024 = vrcp.pop %v1018
  %v1025 = vmul.f32 1.0, %v1024
  %v1026 = vrcp.pop %v1019
  %v1027 = vmul.f32 1.0, %v1026
  %v1028 = vadd.f32 %v931, %v451
  %v1029 = vadd.f32 %v935, %v453
  %v1030 = vadd.f32 %v941, %v455
  %v1031 = vadd.f32 %v945, %v457
  %v1032 = vxor.u32 %v1028, 2147483648
  %v1033 = vxor.u32 %v1029, 2147483648
  %v1034 = vxor.u32 %v1030, 2147483648
  %v1035 = vxor.u32 %v1031, 2147483648
  %v1036 = vmul.f32 %v1032, 1.442695
  %v1037 = vpow.pop %v1036
  %v1038 = vmul.f32 %v1033, 1.442695
  %v1039 = vpow.pop %v1038
  %v1040 = vmul.f32 %v1034, 1.442695
  %v1041 = vpow.pop %v1040
  %v1042 = vmul.f32 %v1035, 1.442695
  %v1043 = vpow.pop %v1042
  %v1044 = vadd.f32 %v1037, 1.0
  %v1045 = vadd.f32 %v1039, 1.0
  %v1046 = vadd.f32 %v1041, 1.0
  %v1047 = vadd.f32 %v1043, 1.0
  %v1048 = vrcp.pop %v1044
  %v1049 = vmul.f32 1.0, %v1048
  %v1050 = vrcp.pop %v1045
  %v1051 = vmul.f32 1.0, %v1050
  %v1052 = vrcp.pop %v1046
  %v1053 = vmul.f32 1.0, %v1052
  %v1054 = vrcp.pop %v1047
  %v1055 = vmul.f32 1.0, %v1054
  %v1056 = vadd.f32 %v982, %v491
  %v1057 = vadd.f32 %v986, %v493
  %v1058 = vadd.f32 %v992, %v495
  %v1059 = vadd.f32 %v996, %v497
  %v1060 = vadd.f32 %v984, %v507
  %v1061 = vadd.f32 %v988, %v509
  %v1062 = vadd.f32 %v994, %v511
  %v1063 = vadd.f32 %v998, %v513
  %v1064 = vmul.f32 %v1021, %v1060
  %v1065 = vmul.f32 %v1023, %v1061
  %v1066 = vmul.f32 %v1025, %v1062
  %v1067 = vmul.f32 %v1027, %v1063
  %v1068 = vadd.f32 %v1056, %v1064
  %v1069 = vadd.f32 %v1057, %v1065
  %v1070 = vadd.f32 %v1058, %v1066
  %v1071 = vadd.f32 %v1059, %v1067
  %v1072 = vtanh.pop %v1068
  %v1073 = vtanh.pop %v1069
  %v1074 = vtanh.pop %v1070
  %v1075 = vtanh.pop %v1071
  %v1076 = vsub.f32 1.0, %v1049
  %v1077 = vsub.f32 1.0, %v1051
  %v1078 = vsub.f32 1.0, %v1053
  %v1079 = vsub.f32 1.0, %v1055
  %v1080 = vmul.f32 %v1076, %v1072
  %v1081 = vmul.f32 %v1077, %v1073
  %v1082 = vmul.f32 %v1078, %v1074
  %v1083 = vmul.f32 %v1079, %v1075
  %v1084 = vmul.f32 %v1049, %v821
  %v1085 = vmul.f32 %v1051, %v822
  %v1086 = vmul.f32 %v1053, %v823
  %v1087 = vmul.f32 %v1055, %v824
  %v1088 = vadd.f32 %v1080, %v1084
  %v1089 = vadd.f32 %v1081, %v1085
  %v1090 = vadd.f32 %v1082, %v1086
  %v1091 = vadd.f32 %v1083, %v1087
  %v1092 = vsel %vm133, %v1088, %v821
  %v1093 = vsel %vm134, %v1089, %v822
  %v1094 = vsel %vm135, %v1090, %v823
  %v1095 = vsel %vm136, %v1091, %v824
  %v1096 = vpack.c.bf16 %v1093, %v1092
  %v1097 = vpack.c.bf16 %v1095, %v1094
  %1098 = vmatprep.subr.bf16.mxu0 0
  %1099 = vmatpush1.bf16.msra.mxu0 0
  %1100 = vmatprep.subr.bf16.mxu0 0
  %1101 = vmatpush1.bf16.msra.mxu0 0
  %1102 = vmatprep.subr.bf16.mxu0 0
  %1103 = vmatpush1.bf16.msra.mxu0 0
  %1104 = vmatprep.subr.bf16.mxu0 0
  %1105 = vmatpush1.bf16.msra.mxu0 0
  %1106 = vmatprep.subr.bf16.mxu0 0
  %1107 = vmatpush1.bf16.msra.mxu0 0
  %1108 = vmatprep.subr.bf16.mxu0 0
  %1109 = vmatpush1.bf16.msra.mxu0 0
  %1110 = vmatprep.subr.bf16.mxu0 0
  %1111 = vmatpush1.bf16.msra.mxu0 %v1097
  %1112 = vmatprep.subr.bf16.mxu0 0
  %1113 = vmatpush1.bf16.msra.mxu0 %v1096
  %1114 = vmatprep.subr.bf16.mxu0 0
  %1115 = vmatpush2.bf16.msra.mxu0 0
  %1116 = vmatprep.subr.bf16.mxu0 0
  %1117 = vmatpush2.bf16.msra.mxu0 0
  %1118 = vmatprep.subr.bf16.mxu0 0
  %1119 = vmatpush2.bf16.msra.mxu0 0
  %1120 = vmatprep.subr.bf16.mxu0 0
  %1121 = vmatpush2.bf16.msra.mxu0 0
  %1122 = vmatprep.subr.bf16.mxu0 0
  %1123 = vmatpush2.bf16.msra.mxu0 0
  %1124 = vmatprep.subr.bf16.mxu0 0
  %1125 = vmatpush2.bf16.msra.mxu0 0
  %1126 = vmatprep.subr.bf16.mxu0 0
  %1127 = vmatpush2.bf16.msra.mxu0 0
  %1128 = vmatprep.subr.bf16.mxu0 0
  %1129 = vmatpush2.bf16.msra.mxu0 0
  %1130 = vmatprep.mubr.bf16.mxu0 0
  %1131 = vmatmul.mubr.bf16.gmra.mxu0 %v159
  %v1132 = vpop.f32.mrf.mxu0
  %v1133 = vadd.f32 0.0, %v1132
  %v1134 = vpop.f32.mrf.mxu0
  %v1135 = vpop.f32.mrf.mxu0
  %v1136 = vadd.f32 0.0, %v1135
  %v1137 = vpop.f32.mrf.mxu0
  %1138 = vmatprep.mubr.bf16.mxu0 0
  %1139 = vmatmul.mubr.bf16.gmra.mxu0 %v162
  %v1140 = vpop.f32.mrf.mxu0
  %v1141 = vadd.f32 0.0, %v1140
  %v1142 = vpop.f32.mrf.mxu0
  %v1143 = vpop.f32.mrf.mxu0
  %v1144 = vadd.f32 0.0, %v1143
  %v1145 = vpop.f32.mrf.mxu0
  %1146 = vdwg.mxu0
  %v1147 = vpack.c.bf16 %v1136, %v1133
  %v1148 = vpack.c.bf16 %v1144, %v1141
  %1151 = vrot.lane.b32.xlu0 %v1096, 32
  %v1152 = vpop.permute.xlu0 %1151
  %1153 = vrot.lane.b32.xlu0 %v1097, 32
  %v1154 = vpop.permute.xlu0 %1153
  %v1157 = vsel %vm157, %v1147, %v1152
  %v1160 = vsel %vm157, %v1148, %v1154
  %v1161 = vsel %vm307, %v1157, 0
  %v1163 = vsel %vm307, %v1160, 0
  %1165 = vmatprep.subr.bf16.mxu0 0
  %1166 = vmatpush1.bf16.msra.mxu0 0
  %1167 = vmatprep.subr.bf16.mxu0 0
  %1168 = vmatpush1.bf16.msra.mxu0 0
  %1169 = vmatprep.subr.bf16.mxu0 0
  %1170 = vmatpush1.bf16.msra.mxu0 0
  %1171 = vmatprep.subr.bf16.mxu0 0
  %1172 = vmatpush1.bf16.msra.mxu0 0
  %1173 = vmatprep.subr.bf16.mxu0 %v288
  %1174 = vmatpush1.bf16.msra.mxu0 %v287
  %1175 = vmatprep.subr.bf16.mxu0 %v284
  %1176 = vmatpush1.bf16.msra.mxu0 %v283
  %1177 = vmatprep.subr.bf16.mxu0 %v280
  %1178 = vmatpush1.bf16.msra.mxu0 %v279
  %1179 = vmatprep.subr.bf16.mxu0 %v276
  %1180 = vmatpush1.bf16.msra.mxu0 %v275
  %1181 = vmatprep.subr.bf16.mxu0 0
  %1182 = vmatpush2.bf16.msra.mxu0 0
  %1183 = vmatprep.subr.bf16.mxu0 0
  %1184 = vmatpush2.bf16.msra.mxu0 0
  %1185 = vmatprep.subr.bf16.mxu0 0
  %1186 = vmatpush2.bf16.msra.mxu0 0
  %1187 = vmatprep.subr.bf16.mxu0 0
  %1188 = vmatpush2.bf16.msra.mxu0 0
  %1189 = vmatprep.subr.bf16.mxu0 0
  %1190 = vmatpush2.bf16.msra.mxu0 0
  %1191 = vmatprep.subr.bf16.mxu0 0
  %1192 = vmatpush2.bf16.msra.mxu0 0
  %1193 = vmatprep.subr.bf16.mxu0 0
  %1194 = vmatpush2.bf16.msra.mxu0 0
  %1195 = vmatprep.subr.bf16.mxu0 0
  %1196 = vmatpush2.bf16.msra.mxu0 0
  %1197 = vmatprep.mubr.bf16.mxu0 0
  %1198 = vmatmul.mubr.bf16.gmra.mxu0 %v1161
  %v1199 = vpop.f32.mrf.mxu0
  %v1200 = vadd.f32 0.0, %v1199
  %v1201 = vpop.f32.mrf.mxu0
  %v1202 = vadd.f32 0.0, %v1201
  %v1203 = vpop.f32.mrf.mxu0
  %v1204 = vadd.f32 0.0, %v1203
  %v1205 = vpop.f32.mrf.mxu0
  %v1206 = vadd.f32 0.0, %v1205
  %1207 = vmatprep.mubr.bf16.mxu0 0
  %1208 = vmatmul.mubr.bf16.gmra.mxu0 %v1163
  %v1209 = vpop.f32.mrf.mxu0
  %v1210 = vadd.f32 0.0, %v1209
  %v1211 = vpop.f32.mrf.mxu0
  %v1212 = vadd.f32 0.0, %v1211
  %v1213 = vpop.f32.mrf.mxu0
  %v1214 = vadd.f32 0.0, %v1213
  %v1215 = vpop.f32.mrf.mxu0
  %v1216 = vadd.f32 0.0, %v1215
  %1217 = vdwg.mxu0
  %1218 = vmatprep.subr.bf16.mxu0 0
  %1219 = vmatpush1.bf16.msra.mxu0 0
  %1220 = vmatprep.subr.bf16.mxu0 0
  %1221 = vmatpush1.bf16.msra.mxu0 0
  %1222 = vmatprep.subr.bf16.mxu0 0
  %1223 = vmatpush1.bf16.msra.mxu0 0
  %1224 = vmatprep.subr.bf16.mxu0 0
  %1225 = vmatpush1.bf16.msra.mxu0 0
  %1226 = vmatprep.subr.bf16.mxu0 %v290
  %1227 = vmatpush1.bf16.msra.mxu0 %v289
  %1228 = vmatprep.subr.bf16.mxu0 %v286
  %1229 = vmatpush1.bf16.msra.mxu0 %v285
  %1230 = vmatprep.subr.bf16.mxu0 %v282
  %1231 = vmatpush1.bf16.msra.mxu0 %v281
  %1232 = vmatprep.subr.bf16.mxu0 %v278
  %1233 = vmatpush1.bf16.msra.mxu0 %v277
  %1234 = vmatprep.subr.bf16.mxu0 0
  %1235 = vmatpush2.bf16.msra.mxu0 0
  %1236 = vmatprep.subr.bf16.mxu0 0
  %1237 = vmatpush2.bf16.msra.mxu0 0
  %1238 = vmatprep.subr.bf16.mxu0 0
  %1239 = vmatpush2.bf16.msra.mxu0 0
  %1240 = vmatprep.subr.bf16.mxu0 0
  %1241 = vmatpush2.bf16.msra.mxu0 0
  %1242 = vmatprep.subr.bf16.mxu0 0
  %1243 = vmatpush2.bf16.msra.mxu0 0
  %1244 = vmatprep.subr.bf16.mxu0 0
  %1245 = vmatpush2.bf16.msra.mxu0 0
  %1246 = vmatprep.subr.bf16.mxu0 0
  %1247 = vmatpush2.bf16.msra.mxu0 0
  %1248 = vmatprep.subr.bf16.mxu0 0
  %1249 = vmatpush2.bf16.msra.mxu0 0
  %1250 = vmatprep.mubr.bf16.mxu0 0
  %1251 = vmatmul.mubr.bf16.gmra.mxu0 %v1161
  %v1252 = vpop.f32.mrf.mxu0
  %v1253 = vadd.f32 0.0, %v1252
  %v1254 = vpop.f32.mrf.mxu0
  %v1255 = vadd.f32 0.0, %v1254
  %v1256 = vpop.f32.mrf.mxu0
  %v1257 = vadd.f32 0.0, %v1256
  %v1258 = vpop.f32.mrf.mxu0
  %v1259 = vadd.f32 0.0, %v1258
  %1260 = vmatprep.mubr.bf16.mxu0 0
  %1261 = vmatmul.mubr.bf16.gmra.mxu0 %v1163
  %v1262 = vpop.f32.mrf.mxu0
  %v1263 = vadd.f32 0.0, %v1262
  %v1264 = vpop.f32.mrf.mxu0
  %v1265 = vadd.f32 0.0, %v1264
  %v1266 = vpop.f32.mrf.mxu0
  %v1267 = vadd.f32 0.0, %v1266
  %v1268 = vpop.f32.mrf.mxu0
  %v1269 = vadd.f32 0.0, %v1268
  %1270 = vdwg.mxu0
  %v1271 = vadd.f32 %v1200, %v137
  %v1272 = vadd.f32 %v1204, %v138
  %v1273 = vadd.f32 %v1210, %v139
  %v1274 = vadd.f32 %v1214, %v140
  %v1275 = vxor.u32 %v1271, 2147483648
  %v1276 = vxor.u32 %v1272, 2147483648
  %v1277 = vxor.u32 %v1273, 2147483648
  %v1278 = vxor.u32 %v1274, 2147483648
  %v1279 = vmul.f32 %v1275, 1.442695
  %v1280 = vpow.pop %v1279
  %v1281 = vmul.f32 %v1276, 1.442695
  %v1282 = vpow.pop %v1281
  %v1283 = vmul.f32 %v1277, 1.442695
  %v1284 = vpow.pop %v1283
  %v1285 = vmul.f32 %v1278, 1.442695
  %v1286 = vpow.pop %v1285
  %v1287 = vadd.f32 %v1280, 1.0
  %v1288 = vadd.f32 %v1282, 1.0
  %v1289 = vadd.f32 %v1284, 1.0
  %v1290 = vadd.f32 %v1286, 1.0
  %v1291 = vrcp.pop %v1287
  %v1292 = vmul.f32 1.0, %v1291
  %v1293 = vrcp.pop %v1288
  %v1294 = vmul.f32 1.0, %v1293
  %v1295 = vrcp.pop %v1289
  %v1296 = vmul.f32 1.0, %v1295
  %v1297 = vrcp.pop %v1290
  %v1298 = vmul.f32 1.0, %v1297
  %v1299 = vadd.f32 %v1202, %v451
  %v1300 = vadd.f32 %v1206, %v453
  %v1301 = vadd.f32 %v1212, %v455
  %v1302 = vadd.f32 %v1216, %v457
  %v1303 = vxor.u32 %v1299, 2147483648
  %v1304 = vxor.u32 %v1300, 2147483648
  %v1305 = vxor.u32 %v1301, 2147483648
  %v1306 = vxor.u32 %v1302, 2147483648
  %v1307 = vmul.f32 %v1303, 1.442695
  %v1308 = vpow.pop %v1307
  %v1309 = vmul.f32 %v1304, 1.442695
  %v1310 = vpow.pop %v1309
  %v1311 = vmul.f32 %v1305, 1.442695
  %v1312 = vpow.pop %v1311
  %v1313 = vmul.f32 %v1306, 1.442695
  %v1314 = vpow.pop %v1313
  %v1315 = vadd.f32 %v1308, 1.0
  %v1316 = vadd.f32 %v1310, 1.0
  %v1317 = vadd.f32 %v1312, 1.0
  %v1318 = vadd.f32 %v1314, 1.0
  %v1319 = vrcp.pop %v1315
  %v1320 = vmul.f32 1.0, %v1319
  %v1321 = vrcp.pop %v1316
  %v1322 = vmul.f32 1.0, %v1321
  %v1323 = vrcp.pop %v1317
  %v1324 = vmul.f32 1.0, %v1323
  %v1325 = vrcp.pop %v1318
  %v1326 = vmul.f32 1.0, %v1325
  %v1327 = vadd.f32 %v1253, %v491
  %v1328 = vadd.f32 %v1257, %v493
  %v1329 = vadd.f32 %v1263, %v495
  %v1330 = vadd.f32 %v1267, %v497
  %v1331 = vadd.f32 %v1255, %v507
  %v1332 = vadd.f32 %v1259, %v509
  %v1333 = vadd.f32 %v1265, %v511
  %v1334 = vadd.f32 %v1269, %v513
  %v1335 = vmul.f32 %v1292, %v1331
  %v1336 = vmul.f32 %v1294, %v1332
  %v1337 = vmul.f32 %v1296, %v1333
  %v1338 = vmul.f32 %v1298, %v1334
  %v1339 = vadd.f32 %v1327, %v1335
  %v1340 = vadd.f32 %v1328, %v1336
  %v1341 = vadd.f32 %v1329, %v1337
  %v1342 = vadd.f32 %v1330, %v1338
  %v1343 = vtanh.pop %v1339
  %v1344 = vtanh.pop %v1340
  %v1345 = vtanh.pop %v1341
  %v1346 = vtanh.pop %v1342
  %v1347 = vsub.f32 1.0, %v1320
  %v1348 = vsub.f32 1.0, %v1322
  %v1349 = vsub.f32 1.0, %v1324
  %v1350 = vsub.f32 1.0, %v1326
  %v1351 = vmul.f32 %v1347, %v1343
  %v1352 = vmul.f32 %v1348, %v1344
  %v1353 = vmul.f32 %v1349, %v1345
  %v1354 = vmul.f32 %v1350, %v1346
  %v1355 = vmul.f32 %v1320, %v1092
  %v1356 = vmul.f32 %v1322, %v1093
  %v1357 = vmul.f32 %v1324, %v1094
  %v1358 = vmul.f32 %v1326, %v1095
  %v1359 = vadd.f32 %v1351, %v1355
  %v1360 = vadd.f32 %v1352, %v1356
  %v1361 = vadd.f32 %v1353, %v1357
  %v1362 = vadd.f32 %v1354, %v1358
  %v1363 = vsel %vm85, %v1359, %v1092
  %v1364 = vsel %vm86, %v1360, %v1093
  %v1365 = vsel %vm87, %v1361, %v1094
  %v1366 = vsel %vm88, %v1362, %v1095
  %v1367 = vpack.c.bf16 %v1364, %v1363
  %v1368 = vpack.c.bf16 %v1366, %v1365
  %1369 = vmatprep.subr.bf16.mxu0 0
  %1370 = vmatpush1.bf16.msra.mxu0 0
  %1371 = vmatprep.subr.bf16.mxu0 0
  %1372 = vmatpush1.bf16.msra.mxu0 0
  %1373 = vmatprep.subr.bf16.mxu0 0
  %1374 = vmatpush1.bf16.msra.mxu0 0
  %1375 = vmatprep.subr.bf16.mxu0 0
  %1376 = vmatpush1.bf16.msra.mxu0 0
  %1377 = vmatprep.subr.bf16.mxu0 0
  %1378 = vmatpush1.bf16.msra.mxu0 0
  %1379 = vmatprep.subr.bf16.mxu0 0
  %1380 = vmatpush1.bf16.msra.mxu0 0
  %1381 = vmatprep.subr.bf16.mxu0 0
  %1382 = vmatpush1.bf16.msra.mxu0 %v1368
  %1383 = vmatprep.subr.bf16.mxu0 0
  %1384 = vmatpush1.bf16.msra.mxu0 %v1367
  %1385 = vmatprep.subr.bf16.mxu0 0
  %1386 = vmatpush2.bf16.msra.mxu0 0
  %1387 = vmatprep.subr.bf16.mxu0 0
  %1388 = vmatpush2.bf16.msra.mxu0 0
  %1389 = vmatprep.subr.bf16.mxu0 0
  %1390 = vmatpush2.bf16.msra.mxu0 0
  %1391 = vmatprep.subr.bf16.mxu0 0
  %1392 = vmatpush2.bf16.msra.mxu0 0
  %1393 = vmatprep.subr.bf16.mxu0 0
  %1394 = vmatpush2.bf16.msra.mxu0 0
  %1395 = vmatprep.subr.bf16.mxu0 0
  %1396 = vmatpush2.bf16.msra.mxu0 0
  %1397 = vmatprep.subr.bf16.mxu0 0
  %1398 = vmatpush2.bf16.msra.mxu0 0
  %1399 = vmatprep.subr.bf16.mxu0 0
  %1400 = vmatpush2.bf16.msra.mxu0 0
  %1401 = vmatprep.mubr.bf16.mxu0 0
  %1402 = vmatmul.mubr.bf16.gmra.mxu0 %v159
  %v1403 = vpop.f32.mrf.mxu0
  %v1404 = vadd.f32 0.0, %v1403
  %v1405 = vpop.f32.mrf.mxu0
  %v1406 = vpop.f32.mrf.mxu0
  %v1407 = vadd.f32 0.0, %v1406
  %v1408 = vpop.f32.mrf.mxu0
  %1409 = vmatprep.mubr.bf16.mxu0 0
  %1410 = vmatmul.mubr.bf16.gmra.mxu0 %v162
  %v1411 = vpop.f32.mrf.mxu0
  %v1412 = vadd.f32 0.0, %v1411
  %v1413 = vpop.f32.mrf.mxu0
  %v1414 = vpop.f32.mrf.mxu0
  %v1415 = vadd.f32 0.0, %v1414
  %v1416 = vpop.f32.mrf.mxu0
  %1417 = vdwg.mxu0
  %v1418 = vpack.c.bf16 %v1407, %v1404
  %v1419 = vpack.c.bf16 %v1415, %v1412
  %1422 = vrot.lane.b32.xlu0 %v1367, 32
  %v1423 = vpop.permute.xlu0 %1422
  %1424 = vrot.lane.b32.xlu0 %v1368, 32
  %v1425 = vpop.permute.xlu0 %1424
  %v1428 = vsel %vm157, %v1418, %v1423
  %v1431 = vsel %vm157, %v1419, %v1425
  %v1432 = vsel %vm307, %v1428, 0
  %v1434 = vsel %vm307, %v1431, 0
  %1436 = vmatprep.subr.bf16.mxu0 0
  %1437 = vmatpush1.bf16.msra.mxu0 0
  %1438 = vmatprep.subr.bf16.mxu0 0
  %1439 = vmatpush1.bf16.msra.mxu0 0
  %1440 = vmatprep.subr.bf16.mxu0 0
  %1441 = vmatpush1.bf16.msra.mxu0 0
  %1442 = vmatprep.subr.bf16.mxu0 0
  %1443 = vmatpush1.bf16.msra.mxu0 0
  %1444 = vmatprep.subr.bf16.mxu0 %v288
  %1445 = vmatpush1.bf16.msra.mxu0 %v287
  %1446 = vmatprep.subr.bf16.mxu0 %v284
  %1447 = vmatpush1.bf16.msra.mxu0 %v283
  %1448 = vmatprep.subr.bf16.mxu0 %v280
  %1449 = vmatpush1.bf16.msra.mxu0 %v279
  %1450 = vmatprep.subr.bf16.mxu0 %v276
  %1451 = vmatpush1.bf16.msra.mxu0 %v275
  %1452 = vmatprep.subr.bf16.mxu0 0
  %1453 = vmatpush2.bf16.msra.mxu0 0
  %1454 = vmatprep.subr.bf16.mxu0 0
  %1455 = vmatpush2.bf16.msra.mxu0 0
  %1456 = vmatprep.subr.bf16.mxu0 0
  %1457 = vmatpush2.bf16.msra.mxu0 0
  %1458 = vmatprep.subr.bf16.mxu0 0
  %1459 = vmatpush2.bf16.msra.mxu0 0
  %1460 = vmatprep.subr.bf16.mxu0 0
  %1461 = vmatpush2.bf16.msra.mxu0 0
  %1462 = vmatprep.subr.bf16.mxu0 0
  %1463 = vmatpush2.bf16.msra.mxu0 0
  %1464 = vmatprep.subr.bf16.mxu0 0
  %1465 = vmatpush2.bf16.msra.mxu0 0
  %1466 = vmatprep.subr.bf16.mxu0 0
  %1467 = vmatpush2.bf16.msra.mxu0 0
  %1468 = vmatprep.mubr.bf16.mxu0 0
  %1469 = vmatmul.mubr.bf16.gmra.mxu0 %v1432
  %v1470 = vpop.f32.mrf.mxu0
  %v1471 = vadd.f32 0.0, %v1470
  %v1472 = vpop.f32.mrf.mxu0
  %v1473 = vadd.f32 0.0, %v1472
  %v1474 = vpop.f32.mrf.mxu0
  %v1475 = vadd.f32 0.0, %v1474
  %v1476 = vpop.f32.mrf.mxu0
  %v1477 = vadd.f32 0.0, %v1476
  %1478 = vmatprep.mubr.bf16.mxu0 0
  %1479 = vmatmul.mubr.bf16.gmra.mxu0 %v1434
  %v1480 = vpop.f32.mrf.mxu0
  %v1481 = vadd.f32 0.0, %v1480
  %v1482 = vpop.f32.mrf.mxu0
  %v1483 = vadd.f32 0.0, %v1482
  %v1484 = vpop.f32.mrf.mxu0
  %v1485 = vadd.f32 0.0, %v1484
  %v1486 = vpop.f32.mrf.mxu0
  %v1487 = vadd.f32 0.0, %v1486
  %1488 = vdwg.mxu0
  %1489 = vmatprep.subr.bf16.mxu0 0
  %1490 = vmatpush1.bf16.msra.mxu0 0
  %1491 = vmatprep.subr.bf16.mxu0 0
  %1492 = vmatpush1.bf16.msra.mxu0 0
  %1493 = vmatprep.subr.bf16.mxu0 0
  %1494 = vmatpush1.bf16.msra.mxu0 0
  %1495 = vmatprep.subr.bf16.mxu0 0
  %1496 = vmatpush1.bf16.msra.mxu0 0
  %1497 = vmatprep.subr.bf16.mxu0 %v290
  %1498 = vmatpush1.bf16.msra.mxu0 %v289
  %1499 = vmatprep.subr.bf16.mxu0 %v286
  %1500 = vmatpush1.bf16.msra.mxu0 %v285
  %1501 = vmatprep.subr.bf16.mxu0 %v282
  %1502 = vmatpush1.bf16.msra.mxu0 %v281
  %1503 = vmatprep.subr.bf16.mxu0 %v278
  %1504 = vmatpush1.bf16.msra.mxu0 %v277
  %1505 = vmatprep.subr.bf16.mxu0 0
  %1506 = vmatpush2.bf16.msra.mxu0 0
  %1507 = vmatprep.subr.bf16.mxu0 0
  %1508 = vmatpush2.bf16.msra.mxu0 0
  %1509 = vmatprep.subr.bf16.mxu0 0
  %1510 = vmatpush2.bf16.msra.mxu0 0
  %1511 = vmatprep.subr.bf16.mxu0 0
  %1512 = vmatpush2.bf16.msra.mxu0 0
  %1513 = vmatprep.subr.bf16.mxu0 0
  %1514 = vmatpush2.bf16.msra.mxu0 0
  %1515 = vmatprep.subr.bf16.mxu0 0
  %1516 = vmatpush2.bf16.msra.mxu0 0
  %1517 = vmatprep.subr.bf16.mxu0 0
  %1518 = vmatpush2.bf16.msra.mxu0 0
  %1519 = vmatprep.subr.bf16.mxu0 0
  %1520 = vmatpush2.bf16.msra.mxu0 0
  %1521 = vmatprep.mubr.bf16.mxu0 0
  %1522 = vmatmul.mubr.bf16.gmra.mxu0 %v1432
  %v1523 = vpop.f32.mrf.mxu0
  %v1524 = vadd.f32 0.0, %v1523
  %v1525 = vpop.f32.mrf.mxu0
  %v1526 = vadd.f32 0.0, %v1525
  %v1527 = vpop.f32.mrf.mxu0
  %v1528 = vadd.f32 0.0, %v1527
  %v1529 = vpop.f32.mrf.mxu0
  %v1530 = vadd.f32 0.0, %v1529
  %1531 = vmatprep.mubr.bf16.mxu0 0
  %1532 = vmatmul.mubr.bf16.gmra.mxu0 %v1434
  %v1533 = vpop.f32.mrf.mxu0
  %v1534 = vadd.f32 0.0, %v1533
  %v1535 = vpop.f32.mrf.mxu0
  %v1536 = vadd.f32 0.0, %v1535
  %v1537 = vpop.f32.mrf.mxu0
  %v1538 = vadd.f32 0.0, %v1537
  %v1539 = vpop.f32.mrf.mxu0
  %v1540 = vadd.f32 0.0, %v1539
  %1541 = vdwg.mxu0
  %v1542 = vadd.f32 %v1471, %v137
  %v1543 = vadd.f32 %v1475, %v138
  %v1544 = vadd.f32 %v1481, %v139
  %v1545 = vadd.f32 %v1485, %v140
  %v1546 = vxor.u32 %v1542, 2147483648
  %v1547 = vxor.u32 %v1543, 2147483648
  %v1548 = vxor.u32 %v1544, 2147483648
  %v1549 = vxor.u32 %v1545, 2147483648
  %v1550 = vmul.f32 %v1546, 1.442695
  %v1551 = vpow.pop %v1550
  %v1552 = vmul.f32 %v1547, 1.442695
  %v1553 = vpow.pop %v1552
  %v1554 = vmul.f32 %v1548, 1.442695
  %v1555 = vpow.pop %v1554
  %v1556 = vmul.f32 %v1549, 1.442695
  %v1557 = vpow.pop %v1556
  %v1558 = vadd.f32 %v1551, 1.0
  %v1559 = vadd.f32 %v1553, 1.0
  %v1560 = vadd.f32 %v1555, 1.0
  %v1561 = vadd.f32 %v1557, 1.0
  %v1562 = vrcp.pop %v1558
  %v1563 = vmul.f32 1.0, %v1562
  %v1564 = vrcp.pop %v1559
  %v1565 = vmul.f32 1.0, %v1564
  %v1566 = vrcp.pop %v1560
  %v1567 = vmul.f32 1.0, %v1566
  %v1568 = vrcp.pop %v1561
  %v1569 = vmul.f32 1.0, %v1568
  %v1570 = vadd.f32 %v1473, %v451
  %v1571 = vadd.f32 %v1477, %v453
  %v1572 = vadd.f32 %v1483, %v455
  %v1573 = vadd.f32 %v1487, %v457
  %v1574 = vxor.u32 %v1570, 2147483648
  %v1575 = vxor.u32 %v1571, 2147483648
  %v1576 = vxor.u32 %v1572, 2147483648
  %v1577 = vxor.u32 %v1573, 2147483648
  %v1578 = vmul.f32 %v1574, 1.442695
  %v1579 = vpow.pop %v1578
  %v1580 = vmul.f32 %v1575, 1.442695
  %v1581 = vpow.pop %v1580
  %v1582 = vmul.f32 %v1576, 1.442695
  %v1583 = vpow.pop %v1582
  %v1584 = vmul.f32 %v1577, 1.442695
  %v1585 = vpow.pop %v1584
  %v1586 = vadd.f32 %v1579, 1.0
  %v1587 = vadd.f32 %v1581, 1.0
  %v1588 = vadd.f32 %v1583, 1.0
  %v1589 = vadd.f32 %v1585, 1.0
  %v1590 = vrcp.pop %v1586
  %v1591 = vmul.f32 1.0, %v1590
  %v1592 = vrcp.pop %v1587
  %v1593 = vmul.f32 1.0, %v1592
  %v1594 = vrcp.pop %v1588
  %v1595 = vmul.f32 1.0, %v1594
  %v1596 = vrcp.pop %v1589
  %v1597 = vmul.f32 1.0, %v1596
  %v1598 = vadd.f32 %v1524, %v491
  %v1599 = vadd.f32 %v1528, %v493
  %v1600 = vadd.f32 %v1534, %v495
  %v1601 = vadd.f32 %v1538, %v497
  %v1602 = vadd.f32 %v1526, %v507
  %v1603 = vadd.f32 %v1530, %v509
  %v1604 = vadd.f32 %v1536, %v511
  %v1605 = vadd.f32 %v1540, %v513
  %v1606 = vmul.f32 %v1563, %v1602
  %v1607 = vmul.f32 %v1565, %v1603
  %v1608 = vmul.f32 %v1567, %v1604
  %v1609 = vmul.f32 %v1569, %v1605
  %v1610 = vadd.f32 %v1598, %v1606
  %v1611 = vadd.f32 %v1599, %v1607
  %v1612 = vadd.f32 %v1600, %v1608
  %v1613 = vadd.f32 %v1601, %v1609
  %v1614 = vtanh.pop %v1610
  %v1615 = vtanh.pop %v1611
  %v1616 = vtanh.pop %v1612
  %v1617 = vtanh.pop %v1613
  %v1618 = vsub.f32 1.0, %v1591
  %v1619 = vsub.f32 1.0, %v1593
  %v1620 = vsub.f32 1.0, %v1595
  %v1621 = vsub.f32 1.0, %v1597
  %v1622 = vmul.f32 %v1618, %v1614
  %v1623 = vmul.f32 %v1619, %v1615
  %v1624 = vmul.f32 %v1620, %v1616
  %v1625 = vmul.f32 %v1621, %v1617
  %v1626 = vmul.f32 %v1591, %v1363
  %v1627 = vmul.f32 %v1593, %v1364
  %v1628 = vmul.f32 %v1595, %v1365
  %v1629 = vmul.f32 %v1597, %v1366
  %v1630 = vadd.f32 %v1622, %v1626
  %v1631 = vadd.f32 %v1623, %v1627
  %v1632 = vadd.f32 %v1624, %v1628
  %v1633 = vadd.f32 %v1625, %v1629
  %v1634 = vsel %vm109, %v1630, %v1363
  %v1635 = vsel %vm110, %v1631, %v1364
  %v1636 = vsel %vm111, %v1632, %v1365
  %v1637 = vsel %vm112, %v1633, %v1366
  %v1638 = vpack.c.bf16 %v1635, %v1634
  %v1639 = vpack.c.bf16 %v1637, %v1636
  %1640 = vmatprep.subr.bf16.mxu0 0
  %1641 = vmatpush1.bf16.msra.mxu0 0
  %1642 = vmatprep.subr.bf16.mxu0 0
  %1643 = vmatpush1.bf16.msra.mxu0 0
  %1644 = vmatprep.subr.bf16.mxu0 0
  %1645 = vmatpush1.bf16.msra.mxu0 0
  %1646 = vmatprep.subr.bf16.mxu0 0
  %1647 = vmatpush1.bf16.msra.mxu0 0
  %1648 = vmatprep.subr.bf16.mxu0 0
  %1649 = vmatpush1.bf16.msra.mxu0 0
  %1650 = vmatprep.subr.bf16.mxu0 0
  %1651 = vmatpush1.bf16.msra.mxu0 0
  %1652 = vmatprep.subr.bf16.mxu0 0
  %1653 = vmatpush1.bf16.msra.mxu0 %v1639
  %1654 = vmatprep.subr.bf16.mxu0 0
  %1655 = vmatpush1.bf16.msra.mxu0 %v1638
  %1656 = vmatprep.subr.bf16.mxu0 0
  %1657 = vmatpush2.bf16.msra.mxu0 0
  %1658 = vmatprep.subr.bf16.mxu0 0
  %1659 = vmatpush2.bf16.msra.mxu0 0
  %1660 = vmatprep.subr.bf16.mxu0 0
  %1661 = vmatpush2.bf16.msra.mxu0 0
  %1662 = vmatprep.subr.bf16.mxu0 0
  %1663 = vmatpush2.bf16.msra.mxu0 0
  %1664 = vmatprep.subr.bf16.mxu0 0
  %1665 = vmatpush2.bf16.msra.mxu0 0
  %1666 = vmatprep.subr.bf16.mxu0 0
  %1667 = vmatpush2.bf16.msra.mxu0 0
  %1668 = vmatprep.subr.bf16.mxu0 0
  %1669 = vmatpush2.bf16.msra.mxu0 0
  %1670 = vmatprep.subr.bf16.mxu0 0
  %1671 = vmatpush2.bf16.msra.mxu0 0
  %1672 = vmatprep.mubr.bf16.mxu0 0
  %1673 = vmatmul.mubr.bf16.gmra.mxu0 %v159
  %v1674 = vpop.f32.mrf.mxu0
  %v1675 = vadd.f32 0.0, %v1674
  %v1676 = vpop.f32.mrf.mxu0
  %v1677 = vpop.f32.mrf.mxu0
  %v1678 = vadd.f32 0.0, %v1677
  %v1679 = vpop.f32.mrf.mxu0
  %1680 = vmatprep.mubr.bf16.mxu0 0
  %1681 = vmatmul.mubr.bf16.gmra.mxu0 %v162
  %v1682 = vpop.f32.mrf.mxu0
  %v1683 = vadd.f32 0.0, %v1682
  %v1684 = vpop.f32.mrf.mxu0
  %v1685 = vpop.f32.mrf.mxu0
  %v1686 = vadd.f32 0.0, %v1685
  %v1687 = vpop.f32.mrf.mxu0
  %1688 = vdwg.mxu0
  %v1689 = vpack.c.bf16 %v1678, %v1675
  %v1690 = vpack.c.bf16 %v1686, %v1683
  %1693 = vrot.lane.b32.xlu0 %v1638, 32
  %v1694 = vpop.permute.xlu0 %1693
  %1695 = vrot.lane.b32.xlu0 %v1639, 32
  %v1696 = vpop.permute.xlu0 %1695
  %v1699 = vsel %vm157, %v1689, %v1694
  %v1702 = vsel %vm157, %v1690, %v1696
  %v1703 = vsel %vm307, %v1699, 0
  %v1705 = vsel %vm307, %v1702, 0
  %1707 = vmatprep.subr.bf16.mxu0 0
  %1708 = vmatpush1.bf16.msra.mxu0 0
  %1709 = vmatprep.subr.bf16.mxu0 0
  %1710 = vmatpush1.bf16.msra.mxu0 0
  %1711 = vmatprep.subr.bf16.mxu0 0
  %1712 = vmatpush1.bf16.msra.mxu0 0
  %1713 = vmatprep.subr.bf16.mxu0 0
  %1714 = vmatpush1.bf16.msra.mxu0 0
  %1715 = vmatprep.subr.bf16.mxu0 %v288
  %1716 = vmatpush1.bf16.msra.mxu0 %v287
  %1717 = vmatprep.subr.bf16.mxu0 %v284
  %1718 = vmatpush1.bf16.msra.mxu0 %v283
  %1719 = vmatprep.subr.bf16.mxu0 %v280
  %1720 = vmatpush1.bf16.msra.mxu0 %v279
  %1721 = vmatprep.subr.bf16.mxu0 %v276
  %1722 = vmatpush1.bf16.msra.mxu0 %v275
  %1723 = vmatprep.subr.bf16.mxu0 0
  %1724 = vmatpush2.bf16.msra.mxu0 0
  %1725 = vmatprep.subr.bf16.mxu0 0
  %1726 = vmatpush2.bf16.msra.mxu0 0
  %1727 = vmatprep.subr.bf16.mxu0 0
  %1728 = vmatpush2.bf16.msra.mxu0 0
  %1729 = vmatprep.subr.bf16.mxu0 0
  %1730 = vmatpush2.bf16.msra.mxu0 0
  %1731 = vmatprep.subr.bf16.mxu0 0
  %1732 = vmatpush2.bf16.msra.mxu0 0
  %1733 = vmatprep.subr.bf16.mxu0 0
  %1734 = vmatpush2.bf16.msra.mxu0 0
  %1735 = vmatprep.subr.bf16.mxu0 0
  %1736 = vmatpush2.bf16.msra.mxu0 0
  %1737 = vmatprep.subr.bf16.mxu0 0
  %1738 = vmatpush2.bf16.msra.mxu0 0
  %1739 = vmatprep.mubr.bf16.mxu0 0
  %1740 = vmatmul.mubr.bf16.gmra.mxu0 %v1703
  %v1741 = vpop.f32.mrf.mxu0
  %v1742 = vadd.f32 0.0, %v1741
  %v1743 = vpop.f32.mrf.mxu0
  %v1744 = vadd.f32 0.0, %v1743
  %v1745 = vpop.f32.mrf.mxu0
  %v1746 = vadd.f32 0.0, %v1745
  %v1747 = vpop.f32.mrf.mxu0
  %v1748 = vadd.f32 0.0, %v1747
  %1749 = vmatprep.mubr.bf16.mxu0 0
  %1750 = vmatmul.mubr.bf16.gmra.mxu0 %v1705
  %v1751 = vpop.f32.mrf.mxu0
  %v1752 = vadd.f32 0.0, %v1751
  %v1753 = vpop.f32.mrf.mxu0
  %v1754 = vadd.f32 0.0, %v1753
  %v1755 = vpop.f32.mrf.mxu0
  %v1756 = vadd.f32 0.0, %v1755
  %v1757 = vpop.f32.mrf.mxu0
  %v1758 = vadd.f32 0.0, %v1757
  %1759 = vdwg.mxu0
  %1760 = vmatprep.subr.bf16.mxu0 0
  %1761 = vmatpush1.bf16.msra.mxu0 0
  %1762 = vmatprep.subr.bf16.mxu0 0
  %1763 = vmatpush1.bf16.msra.mxu0 0
  %1764 = vmatprep.subr.bf16.mxu0 0
  %1765 = vmatpush1.bf16.msra.mxu0 0
  %1766 = vmatprep.subr.bf16.mxu0 0
  %1767 = vmatpush1.bf16.msra.mxu0 0
  %1768 = vmatprep.subr.bf16.mxu0 %v290
  %1769 = vmatpush1.bf16.msra.mxu0 %v289
  %1770 = vmatprep.subr.bf16.mxu0 %v286
  %1771 = vmatpush1.bf16.msra.mxu0 %v285
  %1772 = vmatprep.subr.bf16.mxu0 %v282
  %1773 = vmatpush1.bf16.msra.mxu0 %v281
  %1774 = vmatprep.subr.bf16.mxu0 %v278
  %1775 = vmatpush1.bf16.msra.mxu0 %v277
  %1776 = vmatprep.subr.bf16.mxu0 0
  %1777 = vmatpush2.bf16.msra.mxu0 0
  %1778 = vmatprep.subr.bf16.mxu0 0
  %1779 = vmatpush2.bf16.msra.mxu0 0
  %1780 = vmatprep.subr.bf16.mxu0 0
  %1781 = vmatpush2.bf16.msra.mxu0 0
  %1782 = vmatprep.subr.bf16.mxu0 0
  %1783 = vmatpush2.bf16.msra.mxu0 0
  %1784 = vmatprep.subr.bf16.mxu0 0
  %1785 = vmatpush2.bf16.msra.mxu0 0
  %1786 = vmatprep.subr.bf16.mxu0 0
  %1787 = vmatpush2.bf16.msra.mxu0 0
  %1788 = vmatprep.subr.bf16.mxu0 0
  %1789 = vmatpush2.bf16.msra.mxu0 0
  %1790 = vmatprep.subr.bf16.mxu0 0
  %1791 = vmatpush2.bf16.msra.mxu0 0
  %1792 = vmatprep.mubr.bf16.mxu0 0
  %1793 = vmatmul.mubr.bf16.gmra.mxu0 %v1703
  %v1794 = vpop.f32.mrf.mxu0
  %v1795 = vadd.f32 0.0, %v1794
  %v1796 = vpop.f32.mrf.mxu0
  %v1797 = vadd.f32 0.0, %v1796
  %v1798 = vpop.f32.mrf.mxu0
  %v1799 = vadd.f32 0.0, %v1798
  %v1800 = vpop.f32.mrf.mxu0
  %v1801 = vadd.f32 0.0, %v1800
  %1802 = vmatprep.mubr.bf16.mxu0 0
  %1803 = vmatmul.mubr.bf16.gmra.mxu0 %v1705
  %v1804 = vpop.f32.mrf.mxu0
  %v1805 = vadd.f32 0.0, %v1804
  %v1806 = vpop.f32.mrf.mxu0
  %v1807 = vadd.f32 0.0, %v1806
  %v1808 = vpop.f32.mrf.mxu0
  %v1809 = vadd.f32 0.0, %v1808
  %v1810 = vpop.f32.mrf.mxu0
  %v1811 = vadd.f32 0.0, %v1810
  %1812 = vdwg.mxu0
  %v1813 = vadd.f32 %v1742, %v137
  %v1814 = vadd.f32 %v1746, %v138
  %v1815 = vadd.f32 %v1752, %v139
  %v1816 = vadd.f32 %v1756, %v140
  %v1817 = vxor.u32 %v1813, 2147483648
  %v1818 = vxor.u32 %v1814, 2147483648
  %v1819 = vxor.u32 %v1815, 2147483648
  %v1820 = vxor.u32 %v1816, 2147483648
  %v1821 = vmul.f32 %v1817, 1.442695
  %v1822 = vpow.pop %v1821
  %v1823 = vmul.f32 %v1818, 1.442695
  %v1824 = vpow.pop %v1823
  %v1825 = vmul.f32 %v1819, 1.442695
  %v1826 = vpow.pop %v1825
  %v1827 = vmul.f32 %v1820, 1.442695
  %v1828 = vpow.pop %v1827
  %v1829 = vadd.f32 %v1822, 1.0
  %v1830 = vadd.f32 %v1824, 1.0
  %v1831 = vadd.f32 %v1826, 1.0
  %v1832 = vadd.f32 %v1828, 1.0
  %v1833 = vrcp.pop %v1829
  %v1834 = vmul.f32 1.0, %v1833
  %v1835 = vrcp.pop %v1830
  %v1836 = vmul.f32 1.0, %v1835
  %v1837 = vrcp.pop %v1831
  %v1838 = vmul.f32 1.0, %v1837
  %v1839 = vrcp.pop %v1832
  %v1840 = vmul.f32 1.0, %v1839
  %v1841 = vadd.f32 %v1744, %v451
  %v1842 = vadd.f32 %v1748, %v453
  %v1843 = vadd.f32 %v1754, %v455
  %v1844 = vadd.f32 %v1758, %v457
  %v1845 = vxor.u32 %v1841, 2147483648
  %v1846 = vxor.u32 %v1842, 2147483648
  %v1847 = vxor.u32 %v1843, 2147483648
  %v1848 = vxor.u32 %v1844, 2147483648
  %v1849 = vmul.f32 %v1845, 1.442695
  %v1850 = vpow.pop %v1849
  %v1851 = vmul.f32 %v1846, 1.442695
  %v1852 = vpow.pop %v1851
  %v1853 = vmul.f32 %v1847, 1.442695
  %v1854 = vpow.pop %v1853
  %v1855 = vmul.f32 %v1848, 1.442695
  %v1856 = vpow.pop %v1855
  %v1857 = vadd.f32 %v1850, 1.0
  %v1858 = vadd.f32 %v1852, 1.0
  %v1859 = vadd.f32 %v1854, 1.0
  %v1860 = vadd.f32 %v1856, 1.0
  %v1861 = vrcp.pop %v1857
  %v1862 = vmul.f32 1.0, %v1861
  %v1863 = vrcp.pop %v1858
  %v1864 = vmul.f32 1.0, %v1863
  %v1865 = vrcp.pop %v1859
  %v1866 = vmul.f32 1.0, %v1865
  %v1867 = vrcp.pop %v1860
  %v1868 = vmul.f32 1.0, %v1867
  %v1869 = vadd.f32 %v1795, %v491
  %v1870 = vadd.f32 %v1799, %v493
  %v1871 = vadd.f32 %v1805, %v495
  %v1872 = vadd.f32 %v1809, %v497
  %v1873 = vadd.f32 %v1797, %v507
  %v1874 = vadd.f32 %v1801, %v509
  %v1875 = vadd.f32 %v1807, %v511
  %v1876 = vadd.f32 %v1811, %v513
  %v1877 = vmul.f32 %v1834, %v1873
  %v1878 = vmul.f32 %v1836, %v1874
  %v1879 = vmul.f32 %v1838, %v1875
  %v1880 = vmul.f32 %v1840, %v1876
  %v1881 = vadd.f32 %v1869, %v1877
  %v1882 = vadd.f32 %v1870, %v1878
  %v1883 = vadd.f32 %v1871, %v1879
  %v1884 = vadd.f32 %v1872, %v1880
  %v1885 = vtanh.pop %v1881
  %v1886 = vtanh.pop %v1882
  %v1887 = vtanh.pop %v1883
  %v1888 = vtanh.pop %v1884
  %v1889 = vsub.f32 1.0, %v1862
  %v1890 = vsub.f32 1.0, %v1864
  %v1891 = vsub.f32 1.0, %v1866
  %v1892 = vsub.f32 1.0, %v1868
  %v1893 = vmul.f32 %v1889, %v1885
  %v1894 = vmul.f32 %v1890, %v1886
  %v1895 = vmul.f32 %v1891, %v1887
  %v1896 = vmul.f32 %v1892, %v1888
  %v1897 = vmul.f32 %v1862, %v1634
  %v1898 = vmul.f32 %v1864, %v1635
  %v1899 = vmul.f32 %v1866, %v1636
  %v1900 = vmul.f32 %v1868, %v1637
  %v1901 = vadd.f32 %v1893, %v1897
  %v1902 = vadd.f32 %v1894, %v1898
  %v1903 = vadd.f32 %v1895, %v1899
  %v1904 = vadd.f32 %v1896, %v1900
  %v1905 = vsel %vm133, %v1901, %v1634
  %v1906 = vsel %vm134, %v1902, %v1635
  %v1907 = vsel %vm135, %v1903, %v1636
  %v1908 = vsel %vm136, %v1904, %v1637
  %v1909 = vpack.c.bf16 %v1906, %v1905
  %v1910 = vpack.c.bf16 %v1908, %v1907
  %v1911 = vld [vmem:[%s5] sm:$0xf]
  %v1912 = vld [vmem:[%s5 + $0x4] sm:$0xf]
  %v1913 = vld [vmem:[%s5 + $0x8] sm:$0xf]
  %v1914 = vld [vmem:[%s5 + $0xc] sm:$0xf]
  %v1915 = vld [vmem:[%s6] sm:$0x1]
  %v1917 = vlaneseq
  %v1918 = vshrl.u32 %v1917, 7
  %v1919 = vsub.s32 0, %v1918
  %v1920 = vrot.slane %v1915, %v1919
  %v1926 = vunpack.c.l.b16 %v1911
  %v1927 = vunpack.c.l.b16 %v1912
  %v1928 = vunpack.c.l.b16 %v1913
  %v1929 = vunpack.c.l.b16 %v1914
  %v1930 = vpack.c.b16 %v1927, %v1926
  %v1931 = vpack.c.b16 %v1929, %v1928
  %v1935 = vsel %vm157, %v1909, 0
  %v1938 = vsel %vm157, %v1910, 0
  %1940 = vmatprep.subr.bf16.mxu0 0
  %1941 = vmatpush1.bf16.msra.mxu0 0
  %1942 = vmatprep.subr.bf16.mxu0 0
  %1943 = vmatpush1.bf16.msra.mxu0 0
  %1944 = vmatprep.subr.bf16.mxu0 0
  %1945 = vmatpush1.bf16.msra.mxu0 0
  %1946 = vmatprep.subr.bf16.mxu0 0
  %1947 = vmatpush1.bf16.msra.mxu0 0
  %1948 = vmatprep.subr.bf16.mxu0 0
  %1949 = vmatpush1.bf16.msra.mxu0 0
  %1950 = vmatprep.subr.bf16.mxu0 0
  %1951 = vmatpush1.bf16.msra.mxu0 0
  %1952 = vmatprep.subr.bf16.mxu0 0
  %1953 = vmatpush1.bf16.msra.mxu0 %v1931
  %1954 = vmatprep.subr.bf16.mxu0 0
  %1955 = vmatpush1.bf16.msra.mxu0 %v1930
  %1956 = vmatprep.subr.bf16.mxu0 0
  %1957 = vmatpush2.bf16.msra.mxu0 0
  %1958 = vmatprep.subr.bf16.mxu0 0
  %1959 = vmatpush2.bf16.msra.mxu0 0
  %1960 = vmatprep.subr.bf16.mxu0 0
  %1961 = vmatpush2.bf16.msra.mxu0 0
  %1962 = vmatprep.subr.bf16.mxu0 0
  %1963 = vmatpush2.bf16.msra.mxu0 0
  %1964 = vmatprep.subr.bf16.mxu0 0
  %1965 = vmatpush2.bf16.msra.mxu0 0
  %1966 = vmatprep.subr.bf16.mxu0 0
  %1967 = vmatpush2.bf16.msra.mxu0 0
  %1968 = vmatprep.subr.bf16.mxu0 0
  %1969 = vmatpush2.bf16.msra.mxu0 0
  %1970 = vmatprep.subr.bf16.mxu0 0
  %1971 = vmatpush2.bf16.msra.mxu0 0
  %1972 = vmatprep.mubr.bf16.mxu0 0
  %1973 = vmatmul.mubr.bf16.gmra.mxu0 %v1935
  %v1974 = vpop.f32.mrf.mxu0
  %v1975 = vadd.f32 %v1920, %v1974
  %v1976 = vpop.f32.mrf.mxu0
  %v1977 = vpop.f32.mrf.mxu0
  %v1978 = vadd.f32 %v1920, %v1977
  %v1979 = vpop.f32.mrf.mxu0
  %1980 = vmatprep.mubr.bf16.mxu0 0
  %1981 = vmatmul.mubr.bf16.gmra.mxu0 %v1938
  %v1982 = vpop.f32.mrf.mxu0
  %v1983 = vadd.f32 %v1920, %v1982
  %v1984 = vpop.f32.mrf.mxu0
  %v1985 = vpop.f32.mrf.mxu0
  %v1986 = vadd.f32 %v1920, %v1985
  %v1987 = vpop.f32.mrf.mxu0
  %1988 = vdwg.mxu0
  %v1989 = vmax.f32 %v1975, 0.0
  %v1990 = vmax.f32 %v1978, 0.0
  %v1991 = vmax.f32 %v1983, 0.0
  %v1992 = vmax.f32 %v1986, 0.0
  %v1993 = vpack.c.bf16 %v1990, %v1989
  %v1994 = vpack.c.bf16 %v1992, %v1991
  %v1995 = vld [vmem:[%s7] sm:$0xf]
  %v1996 = vld [vmem:[%s7 + $0x4] sm:$0xf]
  %v1997 = vld [vmem:[%s7 + $0x8] sm:$0xf]
  %v1998 = vld [vmem:[%s7 + $0xc] sm:$0xf]
  %v1999 = vld [vmem:[%s8] sm:$0x1]
  %v2001 = vlaneseq
  %v2002 = vshrl.u32 %v2001, 7
  %v2003 = vsub.s32 0, %v2002
  %v2004 = vrot.slane %v1999, %v2003
  %v2010 = vunpack.c.l.b16 %v1995
  %v2011 = vunpack.c.l.b16 %v1996
  %v2012 = vunpack.c.l.b16 %v1997
  %v2013 = vunpack.c.l.b16 %v1998
  %v2014 = vpack.c.b16 %v2011, %v2010
  %v2015 = vpack.c.b16 %v2013, %v2012
  %v2019 = vsel %vm157, %v1993, 0
  %v2022 = vsel %vm157, %v1994, 0
  %2024 = vmatprep.subr.bf16.mxu0 0
  %2025 = vmatpush1.bf16.msra.mxu0 0
  %2026 = vmatprep.subr.bf16.mxu0 0
  %2027 = vmatpush1.bf16.msra.mxu0 0
  %2028 = vmatprep.subr.bf16.mxu0 0
  %2029 = vmatpush1.bf16.msra.mxu0 0
  %2030 = vmatprep.subr.bf16.mxu0 0
  %2031 = vmatpush1.bf16.msra.mxu0 0
  %2032 = vmatprep.subr.bf16.mxu0 0
  %2033 = vmatpush1.bf16.msra.mxu0 0
  %2034 = vmatprep.subr.bf16.mxu0 0
  %2035 = vmatpush1.bf16.msra.mxu0 0
  %2036 = vmatprep.subr.bf16.mxu0 0
  %2037 = vmatpush1.bf16.msra.mxu0 %v2015
  %2038 = vmatprep.subr.bf16.mxu0 0
  %2039 = vmatpush1.bf16.msra.mxu0 %v2014
  %2040 = vmatprep.subr.bf16.mxu0 0
  %2041 = vmatpush2.bf16.msra.mxu0 0
  %2042 = vmatprep.subr.bf16.mxu0 0
  %2043 = vmatpush2.bf16.msra.mxu0 0
  %2044 = vmatprep.subr.bf16.mxu0 0
  %2045 = vmatpush2.bf16.msra.mxu0 0
  %2046 = vmatprep.subr.bf16.mxu0 0
  %2047 = vmatpush2.bf16.msra.mxu0 0
  %2048 = vmatprep.subr.bf16.mxu0 0
  %2049 = vmatpush2.bf16.msra.mxu0 0
  %2050 = vmatprep.subr.bf16.mxu0 0
  %2051 = vmatpush2.bf16.msra.mxu0 0
  %2052 = vmatprep.subr.bf16.mxu0 0
  %2053 = vmatpush2.bf16.msra.mxu0 0
  %2054 = vmatprep.subr.bf16.mxu0 0
  %2055 = vmatpush2.bf16.msra.mxu0 0
  %2056 = vmatprep.mubr.bf16.mxu0 0
  %2057 = vmatmul.mubr.bf16.gmra.mxu0 %v2019
  %v2058 = vpop.f32.mrf.mxu0
  %v2059 = vadd.f32 %v2004, %v2058
  %v2060 = vpop.f32.mrf.mxu0
  %v2061 = vpop.f32.mrf.mxu0
  %v2062 = vadd.f32 %v2004, %v2061
  %v2063 = vpop.f32.mrf.mxu0
  %2064 = vmatprep.mubr.bf16.mxu0 0
  %2065 = vmatmul.mubr.bf16.gmra.mxu0 %v2022
  %v2066 = vpop.f32.mrf.mxu0
  %v2067 = vadd.f32 %v2004, %v2066
  %v2068 = vpop.f32.mrf.mxu0
  %v2069 = vpop.f32.mrf.mxu0
  %v2070 = vadd.f32 %v2004, %v2069
  %v2071 = vpop.f32.mrf.mxu0
  %2072 = vdwg.mxu0
  %v2073 = vmax.f32 %v2059, 0.0
  %v2074 = vmax.f32 %v2062, 0.0
  %v2075 = vmax.f32 %v2067, 0.0
  %v2076 = vmax.f32 %v2070, 0.0
  %v2077 = vld [vmem:[%s9] sm:$0x1]
  %v2079 = vlaneseq
  %v2080 = vshrl.u32 %v2079, 7
  %v2081 = vsub.s32 0, %v2080
  %v2082 = vrot.slane %v2077, %v2081
  %v2084 = vmul.f32 %v2073, %v2082
  %v2085 = vmul.f32 %v2074, %v2082
  %v2086 = vmul.f32 %v2075, %v2082
  %v2087 = vmul.f32 %v2076, %v2082
  %v2088 = vsel %vm157, %v2084, 0.0
  %2089 = vadd.xlane.f32.xlu0 %v2088
  %v2090 = vpop.xlane.xlu0 %2089
  %v2091 = vsel %vm157, %v2085, 0.0
  %2092 = vadd.xlane.f32.xlu0 %v2091
  %v2093 = vpop.xlane.xlu0 %2092
  %v2094 = vsel %vm157, %v2086, 0.0
  %2095 = vadd.xlane.f32.xlu0 %v2094
  %v2096 = vpop.xlane.xlu0 %2095
  %v2097 = vsel %vm157, %v2087, 0.0
  %2098 = vadd.xlane.f32.xlu0 %v2097
  %v2099 = vpop.xlane.xlu0 %2098
  %v2100 = vld [vmem:[#allocation2] sm:$0x1]
  %v2102 = vlaneseq
  %v2103 = vshrl.u32 %v2102, 7
  %v2104 = vsub.s32 0, %v2103
  %v2105 = vrot.slane %v2100, %v2104
  %v2107 = vadd.f32 %v2090, %v2105
  %v2108 = vadd.f32 %v2093, %v2105
  %v2109 = vadd.f32 %v2096, %v2105
  %v2110 = vadd.f32 %v2099, %v2105
  %vm2111 = vcmask 7168
  %2112 = vst.msk [vmem:[%s11] sm:$0xff] %vm2111, %v2107
  %2113 = vst.msk [vmem:[%s11 + $0x8] sm:$0xff] %vm2111, %v2108
  %2114 = vst.msk [vmem:[%s11 + $0x10] sm:$0xff] %vm2111, %v2109
  %2115 = vst.msk [vmem:[%s11 + $0x18] sm:$0xff] %vm2111, %v2110
  // Predicated region
  $region46: #{_deepsat_forward_impl.1} parent=0 // pred_check
    _
  $region47: #{_deepsat_forward_impl.1} parent=0 // pred_check_branch
    %2117 = sbr.rel (0) target = $region49
  $region48: #{_deepsat_forward_impl.1} parent=0 // pred_region
    _
  $region49: #{_deepsat_forward_impl.1} parent=0 // pred_fallthru
    _
  // Predicated region
  $region50: #{_deepsat_forward_impl.1} parent=0 // pred_check
    _
  $region51: #{_deepsat_forward_impl.1} parent=0 // pred_check_branch
    %2119 = sbr.rel (0) target = $region53
  $region52: #{_deepsat_forward_impl.1} parent=0 // pred_region
    _
  $region53: #{_deepsat_forward_impl.1} parent=0 // pred_fallthru
    _

</llo_original>
